<compile_context>
chip_gen: v6e
topology: v6e:2x2x1
jax: 0.10.0
libtpu: 0.0.40
codegen_flags: <defaults>
</compile_context>

<pallas_src>
import functools

import jax
import jax.numpy as jnp
from jax.experimental import pallas as pl
from jax.experimental.pallas import tpu as pltpu


def _round_up(x, m):
    return ((x + m - 1) // m) * m


def _make_fused_downconv_kernel(Ho, Wo, Ws, Cp):
    """Fused (conv3x3 + InstanceNorm + LeakyReLU) x 2 for one instance."""
    HW = Ho * Wo
    eps = 1e-5
    neg_slope = 0.2

    def inst_norm_lrelu(y):
        # One-pass biased stats per channel (channels on lanes), fused
        # scale-and-shift, then LeakyReLU(0.2).  y: (HW, Cp) float32.
        inv_n = 1.0 / HW
        mean = jnp.sum(y, axis=0, keepdims=True) * inv_n
        ex2 = jnp.sum(y * y, axis=0, keepdims=True) * inv_n
        var = jnp.maximum(ex2 - mean * mean, 0.0)
        inv_std = jax.lax.rsqrt(var + eps)
        yn = y * inv_std - mean * inv_std
        return jnp.where(yn >= 0, yn, neg_slope * yn)

    def kernel(p_ref, w1_ref, w2_ref, o_ref, act_ref, kbuf_ref):
        # --- zero ONLY the 1-px halo ring (interior is overwritten below) ---
        zdt = act_ref.dtype
        act_ref[0:1, :, :] = jnp.zeros((1, Ws, Cp), zdt)
        act_ref[Ho + 1:Ho + 2, :, :] = jnp.zeros((1, Ws, Cp), zdt)
        act_ref[:, 0:1, :] = jnp.zeros((Ho + 2, 1, Cp), zdt)
        act_ref[:, Wo + 1:Wo + 2, :] = jnp.zeros((Ho + 2, 1, Cp), zdt)

        # --- stage 1: 3x3 stride-s conv == ONE matmul with K = 9*Cin --------
        acc = jnp.dot(p_ref[...], w1_ref[...],
                      preferred_element_type=jnp.float32)
        y1 = inst_norm_lrelu(acc)                            # (HW, Cp) f32

        # stage-1 activation with 1-px zero halo, kept in VMEM (no HBM trip)
        act_ref[1:Ho + 1, 1:Wo + 1, :] = (
            y1.reshape(Ho, Wo, Cp).astype(act_ref.dtype))

        # --- stage 2: 3x3 stride-1 conv, dx taps fused along K (= 3*Cp) -----
        acc = jnp.zeros((HW, Cp), jnp.float32)
        for dy in range(3):
            for dx in range(3):
                tap = act_ref[dy:dy + Ho, dx:dx + Wo, :]      # (Ho, Wo, Cp)
                kbuf_ref[:, dx * Cp:(dx + 1) * Cp] = tap.reshape(HW, Cp)
            acc = acc + jnp.dot(kbuf_ref[...], w2_ref[dy],
                                preferred_element_type=jnp.float32)
        o_ref[...] = inst_norm_lrelu(acc).astype(o_ref.dtype)

    return kernel


def down_conv_forward(x_nchw, params, stride=2, compute_dtype=jnp.bfloat16):
    """DownConv forward.  Input/output are NCHW (PyTorch convention).

    compute_dtype: dtype of the MXU operands (patches / weights / stage-1
    activation) and of the kernel's HBM output.  bfloat16 (default) is the
    full-rate MXU path on v5e/v6e/v7x and halves DMA/writeback; accumulation
    and the InstanceNorm / LeakyReLU path stay float32.  Use jnp.float32 for
    a numerically faithful match to the PyTorch module.
    """
    w1, w2 = params["w1"], params["w2"]
    # NOTE: conv biases (params["b1"/"b2"]) are intentionally NOT used: the
    # InstanceNorm mean subtraction right after each conv cancels a
    # per-channel additive bias exactly, so the bias adds are dead work.
    N, Cin, H, W = x_nchw.shape
    Cout = w1.shape[0]
    s = int(stride)
    if s < 1:
        raise ValueError("stride must be >= 1")

    Ho = (H - 1) // s + 1          # == floor((H + 2 - 3) / s) + 1
    Wo = (W - 1) // s + 1
    HW = Ho * Wo
    Cp = _round_up(Cout, 128)      # lane-dense output channels
    K1 = 9 * Cin
    K1p = _round_up(K1, 128)       # lane-dense stage-1 contraction dim
    dsize = jnp.dtype(compute_dtype).itemsize
    sub = 8 * (4 // dsize)         # sublane multiple: 8 for f32, 16 for bf16
    Ws = _round_up(Wo + 2, sub)    # sublane-padded halo-scratch width

    # ---- layout glue (plain JAX, outside the kernel) ------------------------
    x = jnp.transpose(x_nchw, (0, 2, 3, 1))                        # NHWC
    xp = jnp.pad(x, ((0, 0), (1, 1), (1, 1), (0, 0)))              # halo pad
    # im2col-lite for the strided stage-1 conv: every output pixel's 3x3 tap
    # becomes one lane-dense row of length 9*Cin (zero-padded to K1p).
    taps = [xp[:, dy:dy + s * (Ho - 1) + 1:s, dx:dx + s * (Wo - 1) + 1:s, :]
            for dy in range(3) for dx in range(3)]
    patches = jnp.concatenate(taps, axis=-1).reshape(N, HW, K1)
    patches = jnp.pad(patches, ((0, 0), (0, 0), (0, K1p - K1))
                      ).astype(compute_dtype)

    # (Cout, Cin, 3, 3) -> (K1p, Cp); rows ordered (dy, dx, cin) to match the
    # patches layout; zero-padded K rows / Cout cols contribute exactly zero.
    w1_f = jnp.transpose(w1, (2, 3, 1, 0)).reshape(K1, Cout)
    w1_f = jnp.pad(w1_f, ((0, K1p - K1), (0, Cp - Cout))).astype(compute_dtype)
    # (Cout, Cout, 3, 3) -> (3, 3*Cp, Cp): per dy the 3 dx taps are stacked
    # along the contraction dim, matching the kbuf packing in the kernel.
    w2_f = jnp.transpose(w2, (2, 3, 1, 0))                         # (3,3,Ci,Co)
    w2_f = jnp.pad(w2_f, ((0, 0), (0, 0), (0, Cp - Cout), (0, Cp - Cout)))
    w2_f = w2_f.reshape(3, 3 * Cp, Cp).astype(compute_dtype)

    # ---- explicit VMEM budget + cost estimate --------------------------------
    block_bytes = (
        2 * HW * K1p * dsize            # patches block (double-buffered)
        + 2 * K1p * Cp * dsize          # w1
        + 2 * 9 * Cp * Cp * dsize       # w2
        + 2 * HW * Cp * dsize           # output block (compute dtype)
        + (Ho + 2) * Ws * Cp * dsize    # halo scratch
        + HW * 3 * Cp * dsize           # stage-2 K-fusion buffer
        + 8 * HW * Cp * 4               # in-kernel f32 temporaries
    )
    try:
        phys_vmem = getattr(pltpu.get_tpu_info(), "vmem_capacity_bytes",
                            128 * 2 ** 20)
    except Exception:  # pragma: no cover - conservative fallback
        phys_vmem = 128 * 2 ** 20
    vmem_limit = int(min(int(0.72 * phys_vmem),
                         max(2 * block_bytes, 16 * 2 ** 20)))

    cost = pl.CostEstimate(
        flops=int(2 * N * HW * (K1p * Cp + 9 * Cp * Cp)),
        transcendentals=int(2 * N * Cp),
        bytes_accessed=int(N * HW * K1p * dsize
                           + (K1p + 9 * Cp) * Cp * dsize
                           + N * HW * Cp * dsize),
    )

    kernel = _make_fused_downconv_kernel(Ho, Wo, Ws, Cp)

    out = pl.pallas_call(
        kernel,
        out_shape=jax.ShapeDtypeStruct((N, HW, Cp), compute_dtype),
        grid_spec=pltpu.PrefetchScalarGridSpec(
            num_scalar_prefetch=0,
            grid=(N,),
            in_specs=[
                pl.BlockSpec((pl.Squeezed(), HW, K1p), lambda n: (n, 0, 0)),
                pl.BlockSpec((K1p, Cp), lambda n: (0, 0)),
                pl.BlockSpec((3, 3 * Cp, Cp), lambda n: (0, 0, 0)),
            ],
            out_specs=pl.BlockSpec((pl.Squeezed(), HW, Cp),
                                   lambda n: (n, 0, 0)),
            scratch_shapes=[
                pltpu.VMEM((Ho + 2, Ws, Cp), compute_dtype),   # halo activation
                pltpu.VMEM((HW, 3 * Cp), compute_dtype),       # stage-2 K buf
            ],
        ),
        compiler_params=pltpu.CompilerParams(
            dimension_semantics=("parallel",),
            vmem_limit_bytes=vmem_limit,
        ),
        cost_estimate=cost,
    )(patches, w1_f, w2_f)

    out = out[:, :, :Cout].astype(x_nchw.dtype).reshape(N, Ho, Wo, Cout)
    return jnp.transpose(out, (0, 3, 1, 2))                        # NCHW


def init_params(key, in_size, out_size):
    k1, k2, k3, k4 = jax.random.split(key, 4)
    bound1 = 1.0 / jnp.sqrt(in_size * 9)
    bound2 = 1.0 / jnp.sqrt(out_size * 9)
    return {
        "w1": jax.random.uniform(k1, (out_size, in_size, 3, 3),
                                 jnp.float32, -bound1, bound1),
        "b1": jax.random.uniform(k2, (out_size,), jnp.float32, -bound1, bound1),
        "w2": jax.random.uniform(k3, (out_size, out_size, 3, 3),
                                 jnp.float32, -bound2, bound2),
        "b2": jax.random.uniform(k4, (out_size,), jnp.float32, -bound2, bound2),
    }


def _reference_forward(x_nchw, params, stride=2):
    """Pure-JAX reference mirroring the PyTorch module (including biases)."""
    def conv(x, w, b, s):
        y = jax.lax.conv_general_dilated(
            x, w, window_strides=(s, s), padding=((1, 1), (1, 1)),
            dimension_numbers=("NCHW", "OIHW", "NCHW"))
        return y + b.reshape(1, -1, 1, 1)

    def inst_norm_lrelu(y):
        mean = jnp.mean(y, axis=(2, 3), keepdims=True)
        var = jnp.mean((y - mean) ** 2, axis=(2, 3), keepdims=True)
        yn = (y - mean) / jnp.sqrt(var + 1e-5)
        return jnp.where(yn >= 0, yn, 0.2 * yn)

    y = inst_norm_lrelu(conv(x_nchw, params["w1"], params["b1"], stride))
    y = inst_norm_lrelu(conv(y, params["w2"], params["b2"], 1))
    return y


if __name__ == "__main__":
    key = jax.random.PRNGKey(0)
    kx, kp = jax.random.split(key)

    N, Cin, H, W = 2, 4, 16, 16
    Cout = 8
    x = jax.random.normal(kx, (N, Cin, H, W), jnp.float32)
    params = init_params(kp, Cin, Cout)
    ref = _reference_forward(x, params, stride=2)

    # float32 MXU-operand path: numerically faithful to the PyTorch module.
    fwd_f32 = jax.jit(functools.partial(down_conv_forward, stride=2,
                                        compute_dtype=jnp.float32))
    out_f32 = jax.block_until_ready(fwd_f32(x, params))
    assert out_f32.shape == (N, Cout, H // 2, W // 2), out_f32.shape
    err_f32 = float(jnp.max(jnp.abs(out_f32 - ref)))
    assert err_f32 < 2e-3, f"f32 kernel vs reference max abs error {err_f32}"

    # bfloat16 MXU-operand path (default): looser tolerance due to bf16
    # patches / weights / stage-1 activation (accumulation stays f32).
    fwd_bf16 = jax.jit(functools.partial(down_conv_forward, stride=2))
    out_bf16 = jax.block_until_ready(fwd_bf16(x, params))
    assert out_bf16.shape == (N, Cout, H // 2, W // 2), out_bf16.shape
    err_bf16 = float(jnp.max(jnp.abs(out_bf16.astype(jnp.float32) - ref)))
    assert err_bf16 < 1e-1, f"bf16 kernel vs reference max abs error {err_bf16}"

    print("KERNEL_OK")
</pallas_src>

<mosaic_0001>
module attributes {stable_mosaic.version = 11 : i64} {
  func.func @kernel(%arg0: i32, %arg1: memref<1x64x128xf32, #tpu.memory_space<vmem>>, %arg2: memref<128x128xf32, #tpu.memory_space<vmem>>, %arg3: memref<3x384x128xf32, #tpu.memory_space<vmem>>, %arg4: memref<1x64x128xf32, #tpu.memory_space<vmem>>, %arg5: memref<10x16x128xf32, #tpu.memory_space<vmem>>, %arg6: memref<64x384xf32, #tpu.memory_space<vmem>>) attributes {dimension_semantics = [#tpu.dimension_semantics<parallel>], iteration_bounds = array<i64: 2>, scalar_prefetch = 0 : i64, scratch_operands = 2 : i64, tpu.core_type = #tpu.core_type<tc>, window_params = [{transform_indices = @transform_0, window_bounds = array<i64: 1, 64, 128>}, {pipeline_mode = #tpu.pipeline_mode<synchronous>, transform_indices = @transform_1, window_bounds = array<i64: 128, 128>}, {pipeline_mode = #tpu.pipeline_mode<synchronous>, transform_indices = @transform_2, window_bounds = array<i64: 3, 384, 128>}, {transform_indices = @transform_3, window_bounds = array<i64: 1, 64, 128>}]} {
    %cst = arith.constant 0.000000e+00 : f32
    %0 = vector.broadcast %cst : f32 to vector<1x16x128xf32>
    %c0 = arith.constant 0 : index
    %c0_0 = arith.constant 0 : index
    %c0_1 = arith.constant 0 : index
    %1 = vector.load %arg5[%c0, %c0_0, %c0_1] : memref<10x16x128xf32, #tpu.memory_space<vmem>>, vector<1x16x128xf32>
    tpu.vector_store %arg5[%c0, %c0_0, %c0_1], %0 {strides = array<i32>} : memref<10x16x128xf32, #tpu.memory_space<vmem>>, vector<1x16x128xf32>,
    %cst_2 = arith.constant 0.000000e+00 : f32
    %2 = vector.broadcast %cst_2 : f32 to vector<1x16x128xf32>
    %c9 = arith.constant 9 : index
    %c0_3 = arith.constant 0 : index
    %c0_4 = arith.constant 0 : index
    %3 = vector.load %arg5[%c9, %c0_3, %c0_4] : memref<10x16x128xf32, #tpu.memory_space<vmem>>, vector<1x16x128xf32>
    tpu.vector_store %arg5[%c9, %c0_3, %c0_4], %2 {strides = array<i32>} : memref<10x16x128xf32, #tpu.memory_space<vmem>>, vector<1x16x128xf32>,
    %cst_5 = arith.constant 0.000000e+00 : f32
    %4 = vector.broadcast %cst_5 : f32 to vector<10x1x128xf32>
    %c0_6 = arith.constant 0 : index
    %c0_7 = arith.constant 0 : index
    %c0_8 = arith.constant 0 : index
    %5 = vector.load %arg5[%c0_6, %c0_7, %c0_8] : memref<10x16x128xf32, #tpu.memory_space<vmem>>, vector<10x1x128xf32>
    tpu.vector_store %arg5[%c0_6, %c0_7, %c0_8], %4 {strides = array<i32>} : memref<10x16x128xf32, #tpu.memory_space<vmem>>, vector<10x1x128xf32>,
    %cst_9 = arith.constant 0.000000e+00 : f32
    %6 = vector.broadcast %cst_9 : f32 to vector<10x1x128xf32>
    %c0_10 = arith.constant 0 : index
    %c9_11 = arith.constant 9 : index
    %c0_12 = arith.constant 0 : index
    %7 = vector.load %arg5[%c0_10, %c9_11, %c0_12] : memref<10x16x128xf32, #tpu.memory_space<vmem>>, vector<10x1x128xf32>
    tpu.vector_store %arg5[%c0_10, %c9_11, %c0_12], %6 {strides = array<i32>} : memref<10x16x128xf32, #tpu.memory_space<vmem>>, vector<10x1x128xf32>,
    %c0_13 = arith.constant 0 : index
    %c0_14 = arith.constant 0 : index
    %c0_15 = arith.constant 0 : index
    %8 = vector.load %arg1[%c0_13, %c0_14, %c0_15] : memref<1x64x128xf32, #tpu.memory_space<vmem>>, vector<1x64x128xf32>
    %9 = vector.shape_cast %8 : vector<1x64x128xf32> to vector<64x128xf32>
    %c0_16 = arith.constant 0 : index
    %c0_17 = arith.constant 0 : index
    %10 = vector.load %arg2[%c0_16, %c0_17] : memref<128x128xf32, #tpu.memory_space<vmem>>, vector<128x128xf32>
    %cst_18 = arith.constant dense<0.000000e+00> : vector<64x128xf32>
    %11 = tpu.matmul %9, %10, %cst_18 {dimension_numbers = #tpu.dot_dimension_numbers<[1], [0], [0], [1], [0, 0, 1, 1], [], []>} : vector<64x128xf32>, vector<128x128xf32>, vector<64x128xf32> -> vector<64x128xf32>
    %cst_19 = arith.constant dense<0.000000e+00> : vector<128xf32>
    %12 = vector.multi_reduction <add>, %11, %cst_19 [0] : vector<64x128xf32> to vector<128xf32>
    %13 = vector.shape_cast %12 : vector<128xf32> to vector<1x128xf32>
    %cst_20 = arith.constant 1.562500e-02 : f32
    %14 = vector.broadcast %cst_20 : f32 to vector<1x128xf32>
    %15 = arith.mulf %13, %14 : vector<1x128xf32>
    %16 = arith.mulf %11, %11 : vector<64x128xf32>
    %cst_21 = arith.constant dense<0.000000e+00> : vector<128xf32>
    %17 = vector.multi_reduction <add>, %16, %cst_21 [0] : vector<64x128xf32> to vector<128xf32>
    %18 = vector.shape_cast %17 : vector<128xf32> to vector<1x128xf32>
    %cst_22 = arith.constant 1.562500e-02 : f32
    %19 = vector.broadcast %cst_22 : f32 to vector<1x128xf32>
    %20 = arith.mulf %18, %19 : vector<1x128xf32>
    %21 = arith.mulf %15, %15 : vector<1x128xf32>
    %22 = arith.subf %20, %21 : vector<1x128xf32>
    %cst_23 = arith.constant 0.000000e+00 : f32
    %23 = vector.broadcast %cst_23 : f32 to vector<1x128xf32>
    %24 = arith.maximumf %22, %23 : vector<1x128xf32>
    %cst_24 = arith.constant 9.99999974E-6 : f32
    %25 = vector.broadcast %cst_24 : f32 to vector<1x128xf32>
    %26 = arith.addf %24, %25 : vector<1x128xf32>
    %27 = math.rsqrt %26 : vector<1x128xf32>
    %28 = vector.broadcast %27 : vector<1x128xf32> to vector<64x128xf32>
    %29 = arith.mulf %11, %28 : vector<64x128xf32>
    %30 = arith.mulf %15, %27 : vector<1x128xf32>
    %31 = vector.broadcast %30 : vector<1x128xf32> to vector<64x128xf32>
    %32 = arith.subf %29, %31 : vector<64x128xf32>
    %cst_25 = arith.constant 0.000000e+00 : f32
    %33 = vector.broadcast %cst_25 : f32 to vector<64x128xf32>
    %34 = arith.cmpf oge, %32, %33 : vector<64x128xf32>
    %cst_26 = arith.constant 2.000000e-01 : f32
    %35 = vector.broadcast %cst_26 : f32 to vector<64x128xf32>
    %36 = arith.mulf %35, %32 : vector<64x128xf32>
    %37 = arith.select %34, %32, %36 : vector<64x128xi1>, vector<64x128xf32>
    %38 = vector.shape_cast %37 : vector<64x128xf32> to vector<8x8x128xf32>
    %c1 = arith.constant 1 : index
    %c1_27 = arith.constant 1 : index
    %c0_28 = arith.constant 0 : index
    %39 = vector.load %arg5[%c1, %c1_27, %c0_28] : memref<10x16x128xf32, #tpu.memory_space<vmem>>, vector<8x8x128xf32>
    tpu.vector_store %arg5[%c1, %c1_27, %c0_28], %38 {strides = array<i32>} : memref<10x16x128xf32, #tpu.memory_space<vmem>>, vector<8x8x128xf32>,
    %cst_29 = arith.constant 0.000000e+00 : f32
    %40 = vector.broadcast %cst_29 : f32 to vector<64x128xf32>
    %c0_30 = arith.constant 0 : index
    %c0_31 = arith.constant 0 : index
    %c0_32 = arith.constant 0 : index
    %41 = vector.load %arg5[%c0_30, %c0_31, %c0_32] : memref<10x16x128xf32, #tpu.memory_space<vmem>>, vector<8x8x128xf32>
    %42 = vector.shape_cast %41 : vector<8x8x128xf32> to vector<64x128xf32>
    %c0_33 = arith.constant 0 : index
    %c0_34 = arith.constant 0 : index
    %43 = vector.load %arg6[%c0_33, %c0_34] : memref<64x384xf32, #tpu.memory_space<vmem>>, vector<64x128xf32>
    tpu.vector_store %arg6[%c0_33, %c0_34], %42 {strides = array<i32>} : memref<64x384xf32, #tpu.memory_space<vmem>>, vector<64x128xf32>,
    %c0_35 = arith.constant 0 : index
    %c1_36 = arith.constant 1 : index
    %c0_37 = arith.constant 0 : index
    %44 = vector.load %arg5[%c0_35, %c1_36, %c0_37] : memref<10x16x128xf32, #tpu.memory_space<vmem>>, vector<8x8x128xf32>
    %45 = vector.shape_cast %44 : vector<8x8x128xf32> to vector<64x128xf32>
    %c0_38 = arith.constant 0 : index
    %c128 = arith.constant 128 : index
    %46 = vector.load %arg6[%c0_38, %c128] : memref<64x384xf32, #tpu.memory_space<vmem>>, vector<64x128xf32>
    tpu.vector_store %arg6[%c0_38, %c128], %45 {strides = array<i32>} : memref<64x384xf32, #tpu.memory_space<vmem>>, vector<64x128xf32>,
    %c0_39 = arith.constant 0 : index
    %c2 = arith.constant 2 : index
    %c0_40 = arith.constant 0 : index
    %47 = vector.load %arg5[%c0_39, %c2, %c0_40] : memref<10x16x128xf32, #tpu.memory_space<vmem>>, vector<8x8x128xf32>
    %48 = vector.shape_cast %47 : vector<8x8x128xf32> to vector<64x128xf32>
    %c0_41 = arith.constant 0 : index
    %c256 = arith.constant 256 : index
    %49 = vector.load %arg6[%c0_41, %c256] : memref<64x384xf32, #tpu.memory_space<vmem>>, vector<64x128xf32>
    tpu.vector_store %arg6[%c0_41, %c256], %48 {strides = array<i32>} : memref<64x384xf32, #tpu.memory_space<vmem>>, vector<64x128xf32>,
    %c0_42 = arith.constant 0 : index
    %c0_43 = arith.constant 0 : index
    %50 = vector.load %arg6[%c0_42, %c0_43] : memref<64x384xf32, #tpu.memory_space<vmem>>, vector<64x384xf32>
    %c0_44 = arith.constant 0 : index
    %c0_45 = arith.constant 0 : index
    %c0_46 = arith.constant 0 : index
    %51 = vector.load %arg3[%c0_44, %c0_45, %c0_46] : memref<3x384x128xf32, #tpu.memory_space<vmem>>, vector<1x384x128xf32>
    %52 = vector.shape_cast %51 : vector<1x384x128xf32> to vector<384x128xf32>
    %cst_47 = arith.constant dense<0.000000e+00> : vector<64x128xf32>
    %53 = tpu.matmul %50, %52, %cst_47 {dimension_numbers = #tpu.dot_dimension_numbers<[1], [0], [0], [1], [0, 0, 1, 1], [], []>} : vector<64x384xf32>, vector<384x128xf32>, vector<64x128xf32> -> vector<64x128xf32>
    %54 = arith.addf %40, %53 : vector<64x128xf32>
    %c1_48 = arith.constant 1 : index
    %c0_49 = arith.constant 0 : index
    %c0_50 = arith.constant 0 : index
    %55 = vector.load %arg5[%c1_48, %c0_49, %c0_50] : memref<10x16x128xf32, #tpu.memory_space<vmem>>, vector<8x8x128xf32>
    %56 = vector.shape_cast %55 : vector<8x8x128xf32> to vector<64x128xf32>
    %c0_51 = arith.constant 0 : index
    %c0_52 = arith.constant 0 : index
    %57 = vector.load %arg6[%c0_51, %c0_52] : memref<64x384xf32, #tpu.memory_space<vmem>>, vector<64x128xf32>
    tpu.vector_store %arg6[%c0_51, %c0_52], %56 {strides = array<i32>} : memref<64x384xf32, #tpu.memory_space<vmem>>, vector<64x128xf32>,
    %c1_53 = arith.constant 1 : index
    %c1_54 = arith.constant 1 : index
    %c0_55 = arith.constant 0 : index
    %58 = vector.load %arg5[%c1_53, %c1_54, %c0_55] : memref<10x16x128xf32, #tpu.memory_space<vmem>>, vector<8x8x128xf32>
    %59 = vector.shape_cast %58 : vector<8x8x128xf32> to vector<64x128xf32>
    %c0_56 = arith.constant 0 : index
    %c128_57 = arith.constant 128 : index
    %60 = vector.load %arg6[%c0_56, %c128_57] : memref<64x384xf32, #tpu.memory_space<vmem>>, vector<64x128xf32>
    tpu.vector_store %arg6[%c0_56, %c128_57], %59 {strides = array<i32>} : memref<64x384xf32, #tpu.memory_space<vmem>>, vector<64x128xf32>,
    %c1_58 = arith.constant 1 : index
    %c2_59 = arith.constant 2 : index
    %c0_60 = arith.constant 0 : index
    %61 = vector.load %arg5[%c1_58, %c2_59, %c0_60] : memref<10x16x128xf32, #tpu.memory_space<vmem>>, vector<8x8x128xf32>
    %62 = vector.shape_cast %61 : vector<8x8x128xf32> to vector<64x128xf32>
    %c0_61 = arith.constant 0 : index
    %c256_62 = arith.constant 256 : index
    %63 = vector.load %arg6[%c0_61, %c256_62] : memref<64x384xf32, #tpu.memory_space<vmem>>, vector<64x128xf32>
    tpu.vector_store %arg6[%c0_61, %c256_62], %62 {strides = array<i32>} : memref<64x384xf32, #tpu.memory_space<vmem>>, vector<64x128xf32>,
    %c0_63 = arith.constant 0 : index
    %c0_64 = arith.constant 0 : index
    %64 = vector.load %arg6[%c0_63, %c0_64] : memref<64x384xf32, #tpu.memory_space<vmem>>, vector<64x384xf32>
    %c1_65 = arith.constant 1 : index
    %c0_66 = arith.constant 0 : index
    %c0_67 = arith.constant 0 : index
    %65 = vector.load %arg3[%c1_65, %c0_66, %c0_67] : memref<3x384x128xf32, #tpu.memory_space<vmem>>, vector<1x384x128xf32>
    %66 = vector.shape_cast %65 : vector<1x384x128xf32> to vector<384x128xf32>
    %cst_68 = arith.constant dense<0.000000e+00> : vector<64x128xf32>
    %67 = tpu.matmul %64, %66, %cst_68 {dimension_numbers = #tpu.dot_dimension_numbers<[1], [0], [0], [1], [0, 0, 1, 1], [], []>} : vector<64x384xf32>, vector<384x128xf32>, vector<64x128xf32> -> vector<64x128xf32>
    %68 = arith.addf %54, %67 : vector<64x128xf32>
    %c2_69 = arith.constant 2 : index
    %c0_70 = arith.constant 0 : index
    %c0_71 = arith.constant 0 : index
    %69 = vector.load %arg5[%c2_69, %c0_70, %c0_71] : memref<10x16x128xf32, #tpu.memory_space<vmem>>, vector<8x8x128xf32>
    %70 = vector.shape_cast %69 : vector<8x8x128xf32> to vector<64x128xf32>
    %c0_72 = arith.constant 0 : index
    %c0_73 = arith.constant 0 : index
    %71 = vector.load %arg6[%c0_72, %c0_73] : memref<64x384xf32, #tpu.memory_space<vmem>>, vector<64x128xf32>
    tpu.vector_store %arg6[%c0_72, %c0_73], %70 {strides = array<i32>} : memref<64x384xf32, #tpu.memory_space<vmem>>, vector<64x128xf32>,
    %c2_74 = arith.constant 2 : index
    %c1_75 = arith.constant 1 : index
    %c0_76 = arith.constant 0 : index
    %72 = vector.load %arg5[%c2_74, %c1_75, %c0_76] : memref<10x16x128xf32, #tpu.memory_space<vmem>>, vector<8x8x128xf32>
    %73 = vector.shape_cast %72 : vector<8x8x128xf32> to vector<64x128xf32>
    %c0_77 = arith.constant 0 : index
    %c128_78 = arith.constant 128 : index
    %74 = vector.load %arg6[%c0_77, %c128_78] : memref<64x384xf32, #tpu.memory_space<vmem>>, vector<64x128xf32>
    tpu.vector_store %arg6[%c0_77, %c128_78], %73 {strides = array<i32>} : memref<64x384xf32, #tpu.memory_space<vmem>>, vector<64x128xf32>,
    %c2_79 = arith.constant 2 : index
    %c2_80 = arith.constant 2 : index
    %c0_81 = arith.constant 0 : index
    %75 = vector.load %arg5[%c2_79, %c2_80, %c0_81] : memref<10x16x128xf32, #tpu.memory_space<vmem>>, vector<8x8x128xf32>
    %76 = vector.shape_cast %75 : vector<8x8x128xf32> to vector<64x128xf32>
    %c0_82 = arith.constant 0 : index
    %c256_83 = arith.constant 256 : index
    %77 = vector.load %arg6[%c0_82, %c256_83] : memref<64x384xf32, #tpu.memory_space<vmem>>, vector<64x128xf32>
    tpu.vector_store %arg6[%c0_82, %c256_83], %76 {strides = array<i32>} : memref<64x384xf32, #tpu.memory_space<vmem>>, vector<64x128xf32>,
    %c0_84 = arith.constant 0 : index
    %c0_85 = arith.constant 0 : index
    %78 = vector.load %arg6[%c0_84, %c0_85] : memref<64x384xf32, #tpu.memory_space<vmem>>, vector<64x384xf32>
    %c2_86 = arith.constant 2 : index
    %c0_87 = arith.constant 0 : index
    %c0_88 = arith.constant 0 : index
    %79 = vector.load %arg3[%c2_86, %c0_87, %c0_88] : memref<3x384x128xf32, #tpu.memory_space<vmem>>, vector<1x384x128xf32>
    %80 = vector.shape_cast %79 : vector<1x384x128xf32> to vector<384x128xf32>
    %cst_89 = arith.constant dense<0.000000e+00> : vector<64x128xf32>
    %81 = tpu.matmul %78, %80, %cst_89 {dimension_numbers = #tpu.dot_dimension_numbers<[1], [0], [0], [1], [0, 0, 1, 1], [], []>} : vector<64x384xf32>, vector<384x128xf32>, vector<64x128xf32> -> vector<64x128xf32>
    %82 = arith.addf %68, %81 : vector<64x128xf32>
    %cst_90 = arith.constant dense<0.000000e+00> : vector<128xf32>
    %83 = vector.multi_reduction <add>, %82, %cst_90 [0] : vector<64x128xf32> to vector<128xf32>
    %84 = vector.shape_cast %83 : vector<128xf32> to vector<1x128xf32>
    %cst_91 = arith.constant 1.562500e-02 : f32
    %85 = vector.broadcast %cst_91 : f32 to vector<1x128xf32>
    %86 = arith.mulf %84, %85 : vector<1x128xf32>
    %87 = arith.mulf %82, %82 : vector<64x128xf32>
    %cst_92 = arith.constant dense<0.000000e+00> : vector<128xf32>
    %88 = vector.multi_reduction <add>, %87, %cst_92 [0] : vector<64x128xf32> to vector<128xf32>
    %89 = vector.shape_cast %88 : vector<128xf32> to vector<1x128xf32>
    %cst_93 = arith.constant 1.562500e-02 : f32
    %90 = vector.broadcast %cst_93 : f32 to vector<1x128xf32>
    %91 = arith.mulf %89, %90 : vector<1x128xf32>
    %92 = arith.mulf %86, %86 : vector<1x128xf32>
    %93 = arith.subf %91, %92 : vector<1x128xf32>
    %cst_94 = arith.constant 0.000000e+00 : f32
    %94 = vector.broadcast %cst_94 : f32 to vector<1x128xf32>
    %95 = arith.maximumf %93, %94 : vector<1x128xf32>
    %cst_95 = arith.constant 9.99999974E-6 : f32
    %96 = vector.broadcast %cst_95 : f32 to vector<1x128xf32>
    %97 = arith.addf %95, %96 : vector<1x128xf32>
    %98 = math.rsqrt %97 : vector<1x128xf32>
    %99 = vector.broadcast %98 : vector<1x128xf32> to vector<64x128xf32>
    %100 = arith.mulf %82, %99 : vector<64x128xf32>
    %101 = arith.mulf %86, %98 : vector<1x128xf32>
    %102 = vector.broadcast %101 : vector<1x128xf32> to vector<64x128xf32>
    %103 = arith.subf %100, %102 : vector<64x128xf32>
    %cst_96 = arith.constant 0.000000e+00 : f32
    %104 = vector.broadcast %cst_96 : f32 to vector<64x128xf32>
    %105 = arith.cmpf oge, %103, %104 : vector<64x128xf32>
    %cst_97 = arith.constant 2.000000e-01 : f32
    %106 = vector.broadcast %cst_97 : f32 to vector<64x128xf32>
    %107 = arith.mulf %106, %103 : vector<64x128xf32>
    %108 = arith.select %105, %103, %107 : vector<64x128xi1>, vector<64x128xf32>
    %c0_98 = arith.constant 0 : index
    %c0_99 = arith.constant 0 : index
    %c0_100 = arith.constant 0 : index
    %109 = vector.load %arg4[%c0_98, %c0_99, %c0_100] : memref<1x64x128xf32, #tpu.memory_space<vmem>>, vector<1x64x128xf32>
    %110 = vector.shape_cast %109 : vector<1x64x128xf32> to vector<64x128xf32>
    %111 = vector.shape_cast %108 : vector<64x128xf32> to vector<1x64x128xf32>
    tpu.vector_store %arg4[%c0_98, %c0_99, %c0_100], %111 {strides = array<i32>} : memref<1x64x128xf32, #tpu.memory_space<vmem>>, vector<1x64x128xf32>,
    return
  }
  func.func @transform_0(%arg0: i32) -> (i32, i32, i32) {
    %c0_i32 = arith.constant 0 : i32
    %c0_i32_0 = arith.constant 0 : i32
    %c0_i32_1 = arith.constant 0 : i32
    return %arg0, %c0_i32, %c0_i32_0 : i32, i32, i32
  }
  func.func @transform_1(%arg0: i32) -> (i32, i32) {
    %c0_i32 = arith.constant 0 : i32
    %c0_i32_0 = arith.constant 0 : i32
    %c0_i32_1 = arith.constant 0 : i32
    return %c0_i32, %c0_i32_0 : i32, i32
  }
  func.func @transform_2(%arg0: i32) -> (i32, i32, i32) {
    %c0_i32 = arith.constant 0 : i32
    %c0_i32_0 = arith.constant 0 : i32
    %c0_i32_1 = arith.constant 0 : i32
    %c0_i32_2 = arith.constant 0 : i32
    return %c0_i32, %c0_i32_0, %c0_i32_1 : i32, i32, i32
  }
  func.func @transform_3(%arg0: i32) -> (i32, i32, i32) {
    %c0_i32 = arith.constant 0 : i32
    %c0_i32_0 = arith.constant 0 : i32
    %c0_i32_1 = arith.constant 0 : i32
    return %arg0, %c0_i32, %c0_i32_0 : i32, i32, i32
  }
}

</mosaic_0001>

<llo_original>
// kernel: down_conv_forward.1
$region0: #{down_conv_forward.1}
  #allocation0 [shape = 'u32[]', space=smem, size = 0x4, offset = 0x4, fixed_abs, tag = 'smem constant byte address 0x4 - core index']
  #allocation1 [shape = 'u32[144,128]{1,0:T(1,128)}', space=vmem, size = 0x12000, scoped, tag = 'internal scratch']
  #allocation2 [shape = 'f32[10,16,128]{2,1,0:T(8,128)}', space=vmem, size = 0x14000, scoped, tag = 'scratch operand']
  #allocation3 [shape = 'f32[64,384]{1,0:T(8,128)}', space=vmem, size = 0x18000, scoped, tag = 'scratch operand']
  %s0 = inlined_call_operand.vmem [shape: f32[2,64,128], index: 0, kind: input, shape index: {}]
  %s1 = inlined_call_operand.vmem [shape: f32[128,128], index: 1, kind: input, shape index: {}]
  %s2 = inlined_call_operand.vmem [shape: f32[3,384,128], index: 2, kind: input, shape index: {}]
  %s3 = inlined_call_operand.vmem [shape: f32[2,64,128], index: 3, kind: output, shape index: {}]
  %s4 = sld [smem:[#allocation0]]
  $region45: #{down_conv_forward.1} parent=0
    _
  %s6 = ssub.s32 1, %s4
  %s7 = scalar_select 0, %s6, %s4
  loop: start=0, step=1, limit=4
  $region2: #{down_conv_forward.1} parent=0 // loop_pre_header
    _
  $region3: #{down_conv_forward.1} parent=0 // loop_header
    %s9 = sphi 0, %s13
    %p10 = scmp.ge.s32.totalorder %s9, 4
    %s19 = sphi 0, %s21
    %s22 = sphi 0, %s19
    %s23 = sphi 0, %s22
    %s39 = sphi 0, %s23
    %s43 = sphi 0, %s43
    %s45 = sphi 0, %s43
    %s46 = sphi 0, %s45
    %s60 = sphi 0, %s46
    %s64 = sphi 0, %s64
    %s66 = sphi 0, %s64
    %s67 = sphi 0, %s66
    %s81 = sphi 0, %s67
    %s87 = sphi 0, %s89
    %s90 = sphi 0, %s87
    %s91 = sphi 0, %s90
    %s107 = sphi 0, %s91
  $region4: #{down_conv_forward.1} parent=0 // loop_header_branch
    %12 = sbr.rel (%p10) target = $region8
  $region5: #{down_conv_forward.1} parent=0 // loop_body
    %s14 = ssub.s32 %s9, 1
    %s15 = ssub.s32 %s9, 2
    %s16 = sadd.s32 %s9, 1
    %s17 = ssub.s32 %s9, %s16
    %p18 = scmp.eq.s32.totalorder %s17, 0
    %s20 = sadd.s32 %s19, 1
    %s21 = scalar_select %p18, %s19, %s20
    %p24 = pneg %p18
    %p25 = scmp.eq.s32.totalorder %s9, 1
    %p26 = por %p24, %p25
    %p27 = scmp.ne.s32.totalorder %s19, %s22
    %p28 = scmp.eq.s32.totalorder %s9, 0
    %p29 = por %p27, %p28
    %p30 = scmp.ne.s32.totalorder %s19, %s22
    %p31 = scmp.eq.s32.totalorder %s14, 1
    %p32 = por %p30, %p31
    %p33 = scmp.ne.s32.totalorder %s22, %s23
    %p34 = scmp.eq.s32.totalorder %s14, 0
    %p35 = por %p33, %p34
    %p36 = scmp.ne.s32.totalorder %s22, %s23
    %p37 = scmp.eq.s32.totalorder %s15, 1
    %p38 = por %p36, %p37
    %p40 = scmp.ne.s32.totalorder %s23, %s39
    %p41 = scmp.eq.s32.totalorder %s15, 0
    %p42 = por %p40, %p41
    %s44 = sadd.s32 %s43, 1
    %p47 = scmp.eq.s32.totalorder %s9, 1
    %p48 = scmp.ne.s32.totalorder %s43, %s45
    %p49 = scmp.eq.s32.totalorder %s9, 0
    %p50 = por %p48, %p49
    %p51 = scmp.ne.s32.totalorder %s43, %s45
    %p52 = scmp.eq.s32.totalorder %s14, 1
    %p53 = por %p51, %p52
    %p54 = scmp.ne.s32.totalorder %s45, %s46
    %p55 = scmp.eq.s32.totalorder %s14, 0
    %p56 = por %p54, %p55
    %p57 = scmp.ne.s32.totalorder %s45, %s46
    %p58 = scmp.eq.s32.totalorder %s15, 1
    %p59 = por %p57, %p58
    %p61 = scmp.ne.s32.totalorder %s46, %s60
    %p62 = scmp.eq.s32.totalorder %s15, 0
    %p63 = por %p61, %p62
    %s65 = sadd.s32 %s64, 1
    %p68 = scmp.eq.s32.totalorder %s9, 1
    %p69 = scmp.ne.s32.totalorder %s64, %s66
    %p70 = scmp.eq.s32.totalorder %s9, 0
    %p71 = por %p69, %p70
    %p72 = scmp.ne.s32.totalorder %s64, %s66
    %p73 = scmp.eq.s32.totalorder %s14, 1
    %p74 = por %p72, %p73
    %p75 = scmp.ne.s32.totalorder %s66, %s67
    %p76 = scmp.eq.s32.totalorder %s14, 0
    %p77 = por %p75, %p76
    %p78 = scmp.ne.s32.totalorder %s66, %s67
    %p79 = scmp.eq.s32.totalorder %s15, 1
    %p80 = por %p78, %p79
    %p82 = scmp.ne.s32.totalorder %s67, %s81
    %p83 = scmp.eq.s32.totalorder %s15, 0
    %p84 = por %p82, %p83
    %s85 = ssub.s32 %s9, %s16
    %p86 = scmp.eq.s32.totalorder %s85, 0
    %s88 = sadd.s32 %s87, 1
    %s89 = scalar_select %p86, %s87, %s88
    %p92 = pneg %p86
    %p93 = scmp.eq.s32.totalorder %s9, 1
    %p94 = por %p92, %p93
    %p95 = scmp.ne.s32.totalorder %s87, %s90
    %p96 = scmp.eq.s32.totalorder %s9, 0
    %p97 = por %p95, %p96
    %p98 = scmp.ne.s32.totalorder %s87, %s90
    %p99 = scmp.eq.s32.totalorder %s14, 1
    %p100 = por %p98, %p99
    %p101 = scmp.ne.s32.totalorder %s90, %s91
    %p102 = scmp.eq.s32.totalorder %s14, 0
    %p103 = por %p101, %p102
    %p104 = scmp.ne.s32.totalorder %s90, %s91
    %p105 = scmp.eq.s32.totalorder %s15, 1
    %p106 = por %p104, %p105
    %p108 = scmp.ne.s32.totalorder %s91, %s107
    %p109 = scmp.eq.s32.totalorder %s15, 0
    %p110 = por %p108, %p109
    %p111 = scmp.le.s32.totalorder 1, %s9
    %p112 = scmp.lt.s32.totalorder %s9, 3
    %p113 = pnand %p111, %p112
    %p114 = pneg %p113
    // Predicated region
    $region9: #{down_conv_forward.1} parent=5 // pred_check
      _
    $region10: #{down_conv_forward.1} parent=5 // pred_check_branch
      %116 = sbr.rel (%p113) target = $region12
    $region11: #{down_conv_forward.1} parent=5 // pred_region
      %s117 = ssub.s32 %s9, 1
      // Predicated region
      $region13: #{down_conv_forward.1} parent=11 // pred_check
        %p118 = pneg %p56
      $region14: #{down_conv_forward.1} parent=11 // pred_check_branch
        %120 = sbr.rel (%p118) target = $region16
      $region15: #{down_conv_forward.1} parent=11 // pred_region
        _
      $region16: #{down_conv_forward.1} parent=11 // pred_fallthru
        _
      // Predicated region
      $region17: #{down_conv_forward.1} parent=11 // pred_check
        %p121 = pneg %p77
      $region18: #{down_conv_forward.1} parent=11 // pred_check_branch
        %123 = sbr.rel (%p121) target = $region20
      $region19: #{down_conv_forward.1} parent=11 // pred_region
        _
      $region20: #{down_conv_forward.1} parent=11 // pred_fallthru
        _
    $region12: #{down_conv_forward.1} parent=5 // pred_fallthru
      _
    %p124 = scmp.lt.s32.totalorder %s9, 2
    // Predicated region
    $region21: #{down_conv_forward.1} parent=5 // pred_check
      %p125 = pneg %p124
    $region22: #{down_conv_forward.1} parent=5 // pred_check_branch
      %127 = sbr.rel (%p125) target = $region24
    $region23: #{down_conv_forward.1} parent=5 // pred_region
      // Predicated region
      $region25: #{down_conv_forward.1} parent=23 // pred_check
        %p128 = pneg %p29
      $region26: #{down_conv_forward.1} parent=23 // pred_check_branch
        %130 = sbr.rel (%p128) target = $region28
      $region27: #{down_conv_forward.1} parent=23 // pred_region
        %p131 = scmp.lt.s32.totalorder %s9, 1
        %s132 = scalar_select %p131, %s9, 1
        %s133 = smul.addr %s132, 8
        %s134 = smul.addr %s133, 8
        %s135 = scalar_lea.vmem %s0, %s134
      $region28: #{down_conv_forward.1} parent=23 // pred_fallthru
        _
    $region24: #{down_conv_forward.1} parent=5 // pred_fallthru
      _
    %p136 = scmp.le.s32.totalorder 1, %s9
    %p137 = scmp.lt.s32.totalorder %s9, 3
    %p138 = pnand %p136, %p137
    %p139 = pneg %p138
    // Predicated region
    $region29: #{down_conv_forward.1} parent=5 // pred_check
      _
    $region30: #{down_conv_forward.1} parent=5 // pred_check_branch
      %141 = sbr.rel (%p138) target = $region32
    $region31: #{down_conv_forward.1} parent=5 // pred_region
      %s142 = ssub.s32 %s9, 1
      %p143 = scmp.lt.s32.totalorder %s14, 1
      %s144 = scalar_select %p143, %s14, 1
      %s145 = smul.addr %s144, 8
      %s146 = smul.addr %s145, 8
      %s147 = scalar_lea.vmem %s0, %s146
      %p148 = pneg %p35
      %p149 = pneg %p32
      %p150 = pneg %p56
      %p151 = pneg %p53
      %p152 = pneg %p77
      %p153 = pneg %p74
      %p154 = pneg %p103
      %p155 = pneg %p100
      %p156 = scmp.lt.s32.totalorder %s14, 1
      %s157 = scalar_select %p156, %s14, 1
      %s158 = smul.addr %s157, 8
      %s159 = smul.addr %s158, 8
      %s160 = scalar_lea.vmem %s3, %s159
      %p161 = scmp.lt.s32.totalorder %s14, 1
      %s162 = scalar_select %p161, %s14, 1
      %s163 = smul.addr %s162, 8
      %s164 = smul.addr %s163, 8
      %s165 = scalar_lea.vmem %s0, %s164
      %p166 = scmp.lt.s32.totalorder %s14, 1
      %s167 = scalar_select %p166, %s14, 1
      %s168 = smul.addr %s167, 8
      %s169 = smul.addr %s168, 8
      %s170 = scalar_lea.vmem %s3, %s169
      %171 = vst [vmem:[#allocation2] sm:$0xff] 0.0
      %172 = vst [vmem:[#allocation2 + $0x8] sm:$0xff] 0.0
      %s173 = scalar_lea.vmem [#allocation2], 144
      %174 = vst [vmem:[%s173] sm:$0xff] 0.0
      %175 = vst [vmem:[%s173 + $0x8] sm:$0xff] 0.0
      %176 = vst [vmem:[#allocation2] sm:$0x1] 0.0
      %177 = vst [vmem:[#allocation2 + $0x10] sm:$0x1] 0.0
      %178 = vst [vmem:[#allocation2 + $0x20] sm:$0x1] 0.0
      %179 = vst [vmem:[#allocation2 + $0x30] sm:$0x1] 0.0
      %180 = vst [vmem:[#allocation2 + $0x40] sm:$0x1] 0.0
      %181 = vst [vmem:[#allocation2 + $0x50] sm:$0x1] 0.0
      %182 = vst [vmem:[#allocation2 + $0x60] sm:$0x1] 0.0
      %183 = vst [vmem:[#allocation2 + $0x70] sm:$0x1] 0.0
      %184 = vst [vmem:[#allocation2 + $0x80] sm:$0x1] 0.0
      %185 = vst [vmem:[#allocation2 + $0x90] sm:$0x1] 0.0
      %186 = vst [vmem:[#allocation2 + $0x9] sm:$0x1] 0.0
      %187 = vst [vmem:[#allocation2 + $0x19] sm:$0x1] 0.0
      %188 = vst [vmem:[#allocation2 + $0x29] sm:$0x1] 0.0
      %189 = vst [vmem:[#allocation2 + $0x39] sm:$0x1] 0.0
      %190 = vst [vmem:[#allocation2 + $0x49] sm:$0x1] 0.0
      %191 = vst [vmem:[#allocation2 + $0x59] sm:$0x1] 0.0
      %192 = vst [vmem:[#allocation2 + $0x69] sm:$0x1] 0.0
      %193 = vst [vmem:[#allocation2 + $0x79] sm:$0x1] 0.0
      %194 = vst [vmem:[#allocation2 + $0x89] sm:$0x1] 0.0
      %195 = vst [vmem:[#allocation2 + $0x99] sm:$0x1] 0.0
      %v196 = vld [vmem:[%s165] sm:$0xff]
      %v197 = vld [vmem:[%s165 + $0x8] sm:$0xff]
      %v198 = vld [vmem:[%s165 + $0x10] sm:$0xff]
      %v199 = vld [vmem:[%s165 + $0x18] sm:$0xff]
      %v200 = vld [vmem:[%s165 + $0x20] sm:$0xff]
      %v201 = vld [vmem:[%s165 + $0x28] sm:$0xff]
      %v202 = vld [vmem:[%s165 + $0x30] sm:$0xff]
      %v203 = vld [vmem:[%s165 + $0x38] sm:$0xff]
      %v204 = vld [vmem:[%s1] sm:$0xff]
      %v205 = vld [vmem:[%s1 + $0x8] sm:$0xff]
      %v206 = vld [vmem:[%s1 + $0x10] sm:$0xff]
      %v207 = vld [vmem:[%s1 + $0x18] sm:$0xff]
      %v208 = vld [vmem:[%s1 + $0x20] sm:$0xff]
      %v209 = vld [vmem:[%s1 + $0x28] sm:$0xff]
      %v210 = vld [vmem:[%s1 + $0x30] sm:$0xff]
      %v211 = vld [vmem:[%s1 + $0x38] sm:$0xff]
      %v212 = vld [vmem:[%s1 + $0x40] sm:$0xff]
      %v213 = vld [vmem:[%s1 + $0x48] sm:$0xff]
      %v214 = vld [vmem:[%s1 + $0x50] sm:$0xff]
      %v215 = vld [vmem:[%s1 + $0x58] sm:$0xff]
      %v216 = vld [vmem:[%s1 + $0x60] sm:$0xff]
      %v217 = vld [vmem:[%s1 + $0x68] sm:$0xff]
      %v218 = vld [vmem:[%s1 + $0x70] sm:$0xff]
      %v219 = vld [vmem:[%s1 + $0x78] sm:$0xff]
      %220 = vmatprep.subr.mxu0 0.0
      %221 = vmatpush1.msra.mxu0 %v219
      %222 = vmatprep.subr.mxu0 0.0
      %223 = vmatpush1.msra.mxu0 %v218
      %224 = vmatprep.subr.mxu0 0.0
      %225 = vmatpush1.msra.mxu0 %v217
      %226 = vmatprep.subr.mxu0 0.0
      %227 = vmatpush1.msra.mxu0 %v216
      %228 = vmatprep.subr.mxu0 0.0
      %229 = vmatpush1.msra.mxu0 %v215
      %230 = vmatprep.subr.mxu0 0.0
      %231 = vmatpush1.msra.mxu0 %v214
      %232 = vmatprep.subr.mxu0 0.0
      %233 = vmatpush1.msra.mxu0 %v213
      %234 = vmatprep.subr.mxu0 0.0
      %235 = vmatpush1.msra.mxu0 %v212
      %236 = vmatprep.subr.mxu0 0.0
      %237 = vmatpush1.msra.mxu0 %v211
      %238 = vmatprep.subr.mxu0 0.0
      %239 = vmatpush1.msra.mxu0 %v210
      %240 = vmatprep.subr.mxu0 0.0
      %241 = vmatpush1.msra.mxu0 %v209
      %242 = vmatprep.subr.mxu0 0.0
      %243 = vmatpush1.msra.mxu0 %v208
      %244 = vmatprep.subr.mxu0 0.0
      %245 = vmatpush1.msra.mxu0 %v207
      %246 = vmatprep.subr.mxu0 0.0
      %247 = vmatpush1.msra.mxu0 %v206
      %248 = vmatprep.subr.mxu0 0.0
      %249 = vmatpush1.msra.mxu0 %v205
      %250 = vmatprep.subr.mxu0 0.0
      %251 = vmatpush1.msra.mxu0 %v204
      %252 = vmatprep.subr.mxu0 0.0
      %253 = vmatpush2.msra.mxu0 0.0
      %254 = vmatprep.subr.mxu0 0.0
      %255 = vmatpush2.msra.mxu0 0.0
      %256 = vmatprep.subr.mxu0 0.0
      %257 = vmatpush2.msra.mxu0 0.0
      %258 = vmatprep.subr.mxu0 0.0
      %259 = vmatpush2.msra.mxu0 0.0
      %260 = vmatprep.subr.mxu0 0.0
      %261 = vmatpush2.msra.mxu0 0.0
      %262 = vmatprep.subr.mxu0 0.0
      %263 = vmatpush2.msra.mxu0 0.0
      %264 = vmatprep.subr.mxu0 0.0
      %265 = vmatpush2.msra.mxu0 0.0
      %266 = vmatprep.subr.mxu0 0.0
      %267 = vmatpush2.msra.mxu0 0.0
      %268 = vmatprep.subr.mxu0 0.0
      %269 = vmatpush2.msra.mxu0 0.0
      %270 = vmatprep.subr.mxu0 0.0
      %271 = vmatpush2.msra.mxu0 0.0
      %272 = vmatprep.subr.mxu0 0.0
      %273 = vmatpush2.msra.mxu0 0.0
      %274 = vmatprep.subr.mxu0 0.0
      %275 = vmatpush2.msra.mxu0 0.0
      %276 = vmatprep.subr.mxu0 0.0
      %277 = vmatpush2.msra.mxu0 0.0
      %278 = vmatprep.subr.mxu0 0.0
      %279 = vmatpush2.msra.mxu0 0.0
      %280 = vmatprep.subr.mxu0 0.0
      %281 = vmatpush2.msra.mxu0 0.0
      %282 = vmatprep.subr.mxu0 0.0
      %283 = vmatpush2.msra.mxu0 0.0
      %284 = vmatprep.mubr.f32.mxu0 0.0
      %285 = vmatmul.mubr.f32.gmra.mxu0 %v196
      %v286 = vpop.f32.mrf.mxu0
      %v287 = vadd.f32 0.0, %v286
      %v288 = vpop.f32.mrf.mxu0
      %289 = vmatprep.mubr.f32.mxu0 0.0
      %290 = vmatmul.mubr.f32.gmra.mxu0 %v197
      %v291 = vpop.f32.mrf.mxu0
      %v292 = vadd.f32 0.0, %v291
      %v293 = vpop.f32.mrf.mxu0
      %294 = vmatprep.mubr.f32.mxu0 0.0
      %295 = vmatmul.mubr.f32.gmra.mxu0 %v198
      %v296 = vpop.f32.mrf.mxu0
      %v297 = vadd.f32 0.0, %v296
      %v298 = vpop.f32.mrf.mxu0
      %299 = vmatprep.mubr.f32.mxu0 0.0
      %300 = vmatmul.mubr.f32.gmra.mxu0 %v199
      %v301 = vpop.f32.mrf.mxu0
      %v302 = vadd.f32 0.0, %v301
      %v303 = vpop.f32.mrf.mxu0
      %304 = vmatprep.mubr.f32.mxu0 0.0
      %305 = vmatmul.mubr.f32.gmra.mxu0 %v200
      %v306 = vpop.f32.mrf.mxu0
      %v307 = vadd.f32 0.0, %v306
      %v308 = vpop.f32.mrf.mxu0
      %309 = vmatprep.mubr.f32.mxu0 0.0
      %310 = vmatmul.mubr.f32.gmra.mxu0 %v201
      %v311 = vpop.f32.mrf.mxu0
      %v312 = vadd.f32 0.0, %v311
      %v313 = vpop.f32.mrf.mxu0
      %314 = vmatprep.mubr.f32.mxu0 0.0
      %315 = vmatmul.mubr.f32.gmra.mxu0 %v202
      %v316 = vpop.f32.mrf.mxu0
      %v317 = vadd.f32 0.0, %v316
      %v318 = vpop.f32.mrf.mxu0
      %319 = vmatprep.mubr.f32.mxu0 0.0
      %320 = vmatmul.mubr.f32.gmra.mxu0 %v203
      %v321 = vpop.f32.mrf.mxu0
      %v322 = vadd.f32 0.0, %v321
      %v323 = vpop.f32.mrf.mxu0
      %324 = vdwg.mxu0
      %v325 = vadd.f32 %v287, %v292
      %v326 = vadd.f32 %v325, %v297
      %v327 = vadd.f32 %v326, %v302
      %v328 = vadd.f32 %v327, %v307
      %v329 = vadd.f32 %v328, %v312
      %v330 = vadd.f32 %v329, %v317
      %v331 = vadd.f32 %v330, %v322
      %v332 = vrot.slane %v331, 4
      %v333 = vadd.f32 %v331, %v332
      %v334 = vrot.slane %v333, 2
      %v335 = vadd.f32 %v333, %v334
      %v336 = vrot.slane %v335, 1
      %v337 = vadd.f32 %v335, %v336
      %v338 = vmul.f32 %v337, 0.015625
      %v339 = vmul.f32 %v287, %v287
      %v340 = vmul.f32 %v292, %v292
      %v341 = vmul.f32 %v297, %v297
      %v342 = vmul.f32 %v302, %v302
      %v343 = vmul.f32 %v307, %v307
      %v344 = vmul.f32 %v312, %v312
      %v345 = vmul.f32 %v317, %v317
      %v346 = vmul.f32 %v322, %v322
      %v347 = vadd.f32 %v339, %v340
      %v348 = vadd.f32 %v347, %v341
      %v349 = vadd.f32 %v348, %v342
      %v350 = vadd.f32 %v349, %v343
      %v351 = vadd.f32 %v350, %v344
      %v352 = vadd.f32 %v351, %v345
      %v353 = vadd.f32 %v352, %v346
      %v354 = vrot.slane %v353, 4
      %v355 = vadd.f32 %v353, %v354
      %v356 = vrot.slane %v355, 2
      %v357 = vadd.f32 %v355, %v356
      %v358 = vrot.slane %v357, 1
      %v359 = vadd.f32 %v357, %v358
      %v360 = vmul.f32 %v359, 0.015625
      %v361 = vmul.f32 %v338, %v338
      %v362 = vsub.f32 %v360, %v361
      %v363 = vmax.f32 %v362, 0.0
      %v364 = vadd.f32 %v363, 1e-05
      %v365 = vrsqrt.pop %v364
      %v366 = vmul.f32 %v287, %v365
      %v367 = vmul.f32 %v292, %v365
      %v368 = vmul.f32 %v297, %v365
      %v369 = vmul.f32 %v302, %v365
      %v370 = vmul.f32 %v307, %v365
      %v371 = vmul.f32 %v312, %v365
      %v372 = vmul.f32 %v317, %v365
      %v373 = vmul.f32 %v322, %v365
      %v374 = vmul.f32 %v338, %v365
      %v375 = vsub.f32 %v366, %v374
      %v376 = vsub.f32 %v367, %v374
      %v377 = vsub.f32 %v368, %v374
      %v378 = vsub.f32 %v369, %v374
      %v379 = vsub.f32 %v370, %v374
      %v380 = vsub.f32 %v371, %v374
      %v381 = vsub.f32 %v372, %v374
      %v382 = vsub.f32 %v373, %v374
      %vm383 = vcmp.ge.f32.partialorder %v375, 0.0
      %vm384 = vcmp.ge.f32.partialorder %v376, 0.0
      %vm385 = vcmp.ge.f32.partialorder %v377, 0.0
      %vm386 = vcmp.ge.f32.partialorder %v378, 0.0
      %vm387 = vcmp.ge.f32.partialorder %v379, 0.0
      %vm388 = vcmp.ge.f32.partialorder %v380, 0.0
      %vm389 = vcmp.ge.f32.partialorder %v381, 0.0
      %vm390 = vcmp.ge.f32.partialorder %v382, 0.0
      %v391 = vmul.f32 %v375, 0.2
      %v392 = vmul.f32 %v376, 0.2
      %v393 = vmul.f32 %v377, 0.2
      %v394 = vmul.f32 %v378, 0.2
      %v395 = vmul.f32 %v379, 0.2
      %v396 = vmul.f32 %v380, 0.2
      %v397 = vmul.f32 %v381, 0.2
      %v398 = vmul.f32 %v382, 0.2
      %v399 = vsel %vm383, %v375, %v391
      %v400 = vsel %vm384, %v376, %v392
      %v401 = vsel %vm385, %v377, %v393
      %v402 = vsel %vm386, %v378, %v394
      %v403 = vsel %vm387, %v379, %v395
      %v404 = vsel %vm388, %v380, %v396
      %v405 = vsel %vm389, %v381, %v397
      %v406 = vsel %vm390, %v382, %v398
      %s407 = scalar_lea.vmem [#allocation2], 16
      %408 = vst [vmem:[%s407 + $0x1] sm:$0xff] %v399
      %409 = vst [vmem:[%s407 + $0x11] sm:$0xff] %v400
      %410 = vst [vmem:[%s407 + $0x21] sm:$0xff] %v401
      %411 = vst [vmem:[%s407 + $0x31] sm:$0xff] %v402
      %412 = vst [vmem:[%s407 + $0x41] sm:$0xff] %v403
      %413 = vst [vmem:[%s407 + $0x51] sm:$0xff] %v404
      %414 = vst [vmem:[%s407 + $0x61] sm:$0xff] %v405
      %415 = vst [vmem:[%s407 + $0x71] sm:$0xff] %v406
      %v416 = vld [vmem:[#allocation2] sm:$0xff]
      %v417 = vld [vmem:[#allocation2 + $0x10] sm:$0xff]
      %v418 = vld [vmem:[#allocation2 + $0x20] sm:$0xff]
      %v419 = vld [vmem:[#allocation2 + $0x30] sm:$0xff]
      %v420 = vld [vmem:[#allocation2 + $0x40] sm:$0xff]
      %v421 = vld [vmem:[#allocation2 + $0x50] sm:$0xff]
      %v422 = vld [vmem:[#allocation2 + $0x60] sm:$0xff]
      %v423 = vld [vmem:[#allocation2 + $0x70] sm:$0xff]
      %424 = vst [vmem:[#allocation3] sm:$0xff] %v416
      %425 = vst [vmem:[#allocation3 + $0x18] sm:$0xff] %v417
      %426 = vst [vmem:[#allocation3 + $0x30] sm:$0xff] %v418
      %427 = vst [vmem:[#allocation3 + $0x48] sm:$0xff] %v419
      %428 = vst [vmem:[#allocation3 + $0x60] sm:$0xff] %v420
      %429 = vst [vmem:[#allocation3 + $0x78] sm:$0xff] %v421
      %430 = vst [vmem:[#allocation3 + $0x90] sm:$0xff] %v422
      %431 = vst [vmem:[#allocation3 + $0xa8] sm:$0xff] %v423
      %v432 = vld [vmem:[#allocation2 + $0x1] sm:$0xff]
      %v433 = vld [vmem:[#allocation2 + $0x11] sm:$0xff]
      %v434 = vld [vmem:[#allocation2 + $0x21] sm:$0xff]
      %v435 = vld [vmem:[#allocation2 + $0x31] sm:$0xff]
      %v436 = vld [vmem:[#allocation2 + $0x41] sm:$0xff]
      %v437 = vld [vmem:[#allocation2 + $0x51] sm:$0xff]
      %v438 = vld [vmem:[#allocation2 + $0x61] sm:$0xff]
      %v439 = vld [vmem:[#allocation2 + $0x71] sm:$0xff]
      %440 = vst [vmem:[#allocation3 + $0x8] sm:$0xff] %v432
      %441 = vst [vmem:[#allocation3 + $0x20] sm:$0xff] %v433
      %442 = vst [vmem:[#allocation3 + $0x38] sm:$0xff] %v434
      %443 = vst [vmem:[#allocation3 + $0x50] sm:$0xff] %v435
      %444 = vst [vmem:[#allocation3 + $0x68] sm:$0xff] %v436
      %445 = vst [vmem:[#allocation3 + $0x80] sm:$0xff] %v437
      %446 = vst [vmem:[#allocation3 + $0x98] sm:$0xff] %v438
      %447 = vst [vmem:[#allocation3 + $0xb0] sm:$0xff] %v439
      %v448 = vld [vmem:[#allocation2 + $0x2] sm:$0xff]
      %v449 = vld [vmem:[#allocation2 + $0x12] sm:$0xff]
      %v450 = vld [vmem:[#allocation2 + $0x22] sm:$0xff]
      %v451 = vld [vmem:[#allocation2 + $0x32] sm:$0xff]
      %v452 = vld [vmem:[#allocation2 + $0x42] sm:$0xff]
      %v453 = vld [vmem:[#allocation2 + $0x52] sm:$0xff]
      %v454 = vld [vmem:[#allocation2 + $0x62] sm:$0xff]
      %v455 = vld [vmem:[#allocation2 + $0x72] sm:$0xff]
      %456 = vst [vmem:[#allocation3 + $0x10] sm:$0xff] %v448
      %457 = vst [vmem:[#allocation3 + $0x28] sm:$0xff] %v449
      %458 = vst [vmem:[#allocation3 + $0x40] sm:$0xff] %v450
      %459 = vst [vmem:[#allocation3 + $0x58] sm:$0xff] %v451
      %460 = vst [vmem:[#allocation3 + $0x70] sm:$0xff] %v452
      %461 = vst [vmem:[#allocation3 + $0x88] sm:$0xff] %v453
      %462 = vst [vmem:[#allocation3 + $0xa0] sm:$0xff] %v454
      %463 = vst [vmem:[#allocation3 + $0xb8] sm:$0xff] %v455
      %v464 = vld [vmem:[#allocation3] sm:$0xff]
      %v465 = vld [vmem:[#allocation3 + $0x8] sm:$0xff]
      %v466 = vld [vmem:[#allocation3 + $0x10] sm:$0xff]
      %v467 = vld [vmem:[#allocation3 + $0x18] sm:$0xff]
      %v468 = vld [vmem:[#allocation3 + $0x20] sm:$0xff]
      %v469 = vld [vmem:[#allocation3 + $0x28] sm:$0xff]
      %v470 = vld [vmem:[#allocation3 + $0x30] sm:$0xff]
      %v471 = vld [vmem:[#allocation3 + $0x38] sm:$0xff]
      %v472 = vld [vmem:[#allocation3 + $0x40] sm:$0xff]
      %v473 = vld [vmem:[#allocation3 + $0x48] sm:$0xff]
      %v474 = vld [vmem:[#allocation3 + $0x50] sm:$0xff]
      %v475 = vld [vmem:[#allocation3 + $0x58] sm:$0xff]
      %v476 = vld [vmem:[#allocation3 + $0x60] sm:$0xff]
      %v477 = vld [vmem:[#allocation3 + $0x68] sm:$0xff]
      %v478 = vld [vmem:[#allocation3 + $0x70] sm:$0xff]
      %v479 = vld [vmem:[#allocation3 + $0x78] sm:$0xff]
      %v480 = vld [vmem:[#allocation3 + $0x80] sm:$0xff]
      %v481 = vld [vmem:[#allocation3 + $0x88] sm:$0xff]
      %v482 = vld [vmem:[#allocation3 + $0x90] sm:$0xff]
      %v483 = vld [vmem:[#allocation3 + $0x98] sm:$0xff]
      %v484 = vld [vmem:[#allocation3 + $0xa0] sm:$0xff]
      %v485 = vld [vmem:[#allocation3 + $0xa8] sm:$0xff]
      %v486 = vld [vmem:[#allocation3 + $0xb0] sm:$0xff]
      %v487 = vld [vmem:[#allocation3 + $0xb8] sm:$0xff]
      %v488 = vld [vmem:[%s2] sm:$0xff]
      %v489 = vld [vmem:[%s2 + $0x8] sm:$0xff]
      %v490 = vld [vmem:[%s2 + $0x10] sm:$0xff]
      %v491 = vld [vmem:[%s2 + $0x18] sm:$0xff]
      %v492 = vld [vmem:[%s2 + $0x20] sm:$0xff]
      %v493 = vld [vmem:[%s2 + $0x28] sm:$0xff]
      %v494 = vld [vmem:[%s2 + $0x30] sm:$0xff]
      %v495 = vld [vmem:[%s2 + $0x38] sm:$0xff]
      %v496 = vld [vmem:[%s2 + $0x40] sm:$0xff]
      %v497 = vld [vmem:[%s2 + $0x48] sm:$0xff]
      %v498 = vld [vmem:[%s2 + $0x50] sm:$0xff]
      %v499 = vld [vmem:[%s2 + $0x58] sm:$0xff]
      %v500 = vld [vmem:[%s2 + $0x60] sm:$0xff]
      %v501 = vld [vmem:[%s2 + $0x68] sm:$0xff]
      %v502 = vld [vmem:[%s2 + $0x70] sm:$0xff]
      %v503 = vld [vmem:[%s2 + $0x78] sm:$0xff]
      %v504 = vld [vmem:[%s2 + $0x80] sm:$0xff]
      %v505 = vld [vmem:[%s2 + $0x88] sm:$0xff]
      %v506 = vld [vmem:[%s2 + $0x90] sm:$0xff]
      %v507 = vld [vmem:[%s2 + $0x98] sm:$0xff]
      %v508 = vld [vmem:[%s2 + $0xa0] sm:$0xff]
      %v509 = vld [vmem:[%s2 + $0xa8] sm:$0xff]
      %v510 = vld [vmem:[%s2 + $0xb0] sm:$0xff]
      %v511 = vld [vmem:[%s2 + $0xb8] sm:$0xff]
      %v512 = vld [vmem:[%s2 + $0xc0] sm:$0xff]
      %v513 = vld [vmem:[%s2 + $0xc8] sm:$0xff]
      %v514 = vld [vmem:[%s2 + $0xd0] sm:$0xff]
      %v515 = vld [vmem:[%s2 + $0xd8] sm:$0xff]
      %v516 = vld [vmem:[%s2 + $0xe0] sm:$0xff]
      %v517 = vld [vmem:[%s2 + $0xe8] sm:$0xff]
      %v518 = vld [vmem:[%s2 + $0xf0] sm:$0xff]
      %v519 = vld [vmem:[%s2 + $0xf8] sm:$0xff]
      %v520 = vld [vmem:[%s2 + $0x100] sm:$0xff]
      %v521 = vld [vmem:[%s2 + $0x108] sm:$0xff]
      %v522 = vld [vmem:[%s2 + $0x110] sm:$0xff]
      %v523 = vld [vmem:[%s2 + $0x118] sm:$0xff]
      %v524 = vld [vmem:[%s2 + $0x120] sm:$0xff]
      %v525 = vld [vmem:[%s2 + $0x128] sm:$0xff]
      %v526 = vld [vmem:[%s2 + $0x130] sm:$0xff]
      %v527 = vld [vmem:[%s2 + $0x138] sm:$0xff]
      %v528 = vld [vmem:[%s2 + $0x140] sm:$0xff]
      %v529 = vld [vmem:[%s2 + $0x148] sm:$0xff]
      %v530 = vld [vmem:[%s2 + $0x150] sm:$0xff]
      %v531 = vld [vmem:[%s2 + $0x158] sm:$0xff]
      %v532 = vld [vmem:[%s2 + $0x160] sm:$0xff]
      %v533 = vld [vmem:[%s2 + $0x168] sm:$0xff]
      %v534 = vld [vmem:[%s2 + $0x170] sm:$0xff]
      %v535 = vld [vmem:[%s2 + $0x178] sm:$0xff]
      %v536 = vld [vmem:[%s407] sm:$0xff]
      %v537 = vld [vmem:[%s407 + $0x10] sm:$0xff]
      %v538 = vld [vmem:[%s407 + $0x20] sm:$0xff]
      %v539 = vld [vmem:[%s407 + $0x30] sm:$0xff]
      %v540 = vld [vmem:[%s407 + $0x40] sm:$0xff]
      %v541 = vld [vmem:[%s407 + $0x50] sm:$0xff]
      %v542 = vld [vmem:[%s407 + $0x60] sm:$0xff]
      %v543 = vld [vmem:[%s407 + $0x70] sm:$0xff]
      %544 = vst [vmem:[#allocation3] sm:$0xff] %v536
      %545 = vst [vmem:[#allocation3 + $0x18] sm:$0xff] %v537
      %546 = vst [vmem:[#allocation3 + $0x30] sm:$0xff] %v538
      %547 = vst [vmem:[#allocation3 + $0x48] sm:$0xff] %v539
      %548 = vst [vmem:[#allocation3 + $0x60] sm:$0xff] %v540
      %549 = vst [vmem:[#allocation3 + $0x78] sm:$0xff] %v541
      %550 = vst [vmem:[#allocation3 + $0x90] sm:$0xff] %v542
      %551 = vst [vmem:[#allocation3 + $0xa8] sm:$0xff] %v543
      %v552 = vld [vmem:[%s407 + $0x1] sm:$0xff]
      %v553 = vld [vmem:[%s407 + $0x11] sm:$0xff]
      %v554 = vld [vmem:[%s407 + $0x21] sm:$0xff]
      %v555 = vld [vmem:[%s407 + $0x31] sm:$0xff]
      %v556 = vld [vmem:[%s407 + $0x41] sm:$0xff]
      %v557 = vld [vmem:[%s407 + $0x51] sm:$0xff]
      %v558 = vld [vmem:[%s407 + $0x61] sm:$0xff]
      %v559 = vld [vmem:[%s407 + $0x71] sm:$0xff]
      %560 = vst [vmem:[#allocation3 + $0x8] sm:$0xff] %v552
      %561 = vst [vmem:[#allocation3 + $0x20] sm:$0xff] %v553
      %562 = vst [vmem:[#allocation3 + $0x38] sm:$0xff] %v554
      %563 = vst [vmem:[#allocation3 + $0x50] sm:$0xff] %v555
      %564 = vst [vmem:[#allocation3 + $0x68] sm:$0xff] %v556
      %565 = vst [vmem:[#allocation3 + $0x80] sm:$0xff] %v557
      %566 = vst [vmem:[#allocation3 + $0x98] sm:$0xff] %v558
      %567 = vst [vmem:[#allocation3 + $0xb0] sm:$0xff] %v559
      %v568 = vld [vmem:[%s407 + $0x2] sm:$0xff]
      %v569 = vld [vmem:[%s407 + $0x12] sm:$0xff]
      %v570 = vld [vmem:[%s407 + $0x22] sm:$0xff]
      %v571 = vld [vmem:[%s407 + $0x32] sm:$0xff]
      %v572 = vld [vmem:[%s407 + $0x42] sm:$0xff]
      %v573 = vld [vmem:[%s407 + $0x52] sm:$0xff]
      %v574 = vld [vmem:[%s407 + $0x62] sm:$0xff]
      %v575 = vld [vmem:[%s407 + $0x72] sm:$0xff]
      %576 = vst [vmem:[#allocation3 + $0x10] sm:$0xff] %v568
      %577 = vst [vmem:[#allocation3 + $0x28] sm:$0xff] %v569
      %578 = vst [vmem:[#allocation3 + $0x40] sm:$0xff] %v570
      %579 = vst [vmem:[#allocation3 + $0x58] sm:$0xff] %v571
      %580 = vst [vmem:[#allocation3 + $0x70] sm:$0xff] %v572
      %581 = vst [vmem:[#allocation3 + $0x88] sm:$0xff] %v573
      %582 = vst [vmem:[#allocation3 + $0xa0] sm:$0xff] %v574
      %583 = vst [vmem:[#allocation3 + $0xb8] sm:$0xff] %v575
      %v584 = vld [vmem:[#allocation3] sm:$0xff]
      %v585 = vld [vmem:[#allocation3 + $0x8] sm:$0xff]
      %v586 = vld [vmem:[#allocation3 + $0x10] sm:$0xff]
      %v587 = vld [vmem:[#allocation3 + $0x18] sm:$0xff]
      %v588 = vld [vmem:[#allocation3 + $0x20] sm:$0xff]
      %v589 = vld [vmem:[#allocation3 + $0x28] sm:$0xff]
      %v590 = vld [vmem:[#allocation3 + $0x30] sm:$0xff]
      %v591 = vld [vmem:[#allocation3 + $0x38] sm:$0xff]
      %v592 = vld [vmem:[#allocation3 + $0x40] sm:$0xff]
      %v593 = vld [vmem:[#allocation3 + $0x48] sm:$0xff]
      %v594 = vld [vmem:[#allocation3 + $0x50] sm:$0xff]
      %v595 = vld [vmem:[#allocation3 + $0x58] sm:$0xff]
      %v596 = vld [vmem:[#allocation3 + $0x60] sm:$0xff]
      %v597 = vld [vmem:[#allocation3 + $0x68] sm:$0xff]
      %v598 = vld [vmem:[#allocation3 + $0x70] sm:$0xff]
      %v599 = vld [vmem:[#allocation3 + $0x78] sm:$0xff]
      %v600 = vld [vmem:[#allocation3 + $0x80] sm:$0xff]
      %v601 = vld [vmem:[#allocation3 + $0x88] sm:$0xff]
      %v602 = vld [vmem:[#allocation3 + $0x90] sm:$0xff]
      %v603 = vld [vmem:[#allocation3 + $0x98] sm:$0xff]
      %v604 = vld [vmem:[#allocation3 + $0xa0] sm:$0xff]
      %v605 = vld [vmem:[#allocation3 + $0xa8] sm:$0xff]
      %v606 = vld [vmem:[#allocation3 + $0xb0] sm:$0xff]
      %v607 = vld [vmem:[#allocation3 + $0xb8] sm:$0xff]
      %s608 = scalar_lea.vmem %s2, 384
      %v609 = vld [vmem:[%s608] sm:$0xff]
      %v610 = vld [vmem:[%s608 + $0x8] sm:$0xff]
      %v611 = vld [vmem:[%s608 + $0x10] sm:$0xff]
      %v612 = vld [vmem:[%s608 + $0x18] sm:$0xff]
      %v613 = vld [vmem:[%s608 + $0x20] sm:$0xff]
      %v614 = vld [vmem:[%s608 + $0x28] sm:$0xff]
      %v615 = vld [vmem:[%s608 + $0x30] sm:$0xff]
      %v616 = vld [vmem:[%s608 + $0x38] sm:$0xff]
      %v617 = vld [vmem:[%s608 + $0x40] sm:$0xff]
      %v618 = vld [vmem:[%s608 + $0x48] sm:$0xff]
      %v619 = vld [vmem:[%s608 + $0x50] sm:$0xff]
      %v620 = vld [vmem:[%s608 + $0x58] sm:$0xff]
      %v621 = vld [vmem:[%s608 + $0x60] sm:$0xff]
      %v622 = vld [vmem:[%s608 + $0x68] sm:$0xff]
      %v623 = vld [vmem:[%s608 + $0x70] sm:$0xff]
      %v624 = vld [vmem:[%s608 + $0x78] sm:$0xff]
      %v625 = vld [vmem:[%s608 + $0x80] sm:$0xff]
      %v626 = vld [vmem:[%s608 + $0x88] sm:$0xff]
      %v627 = vld [vmem:[%s608 + $0x90] sm:$0xff]
      %v628 = vld [vmem:[%s608 + $0x98] sm:$0xff]
      %v629 = vld [vmem:[%s608 + $0xa0] sm:$0xff]
      %v630 = vld [vmem:[%s608 + $0xa8] sm:$0xff]
      %v631 = vld [vmem:[%s608 + $0xb0] sm:$0xff]
      %v632 = vld [vmem:[%s608 + $0xb8] sm:$0xff]
      %v633 = vld [vmem:[%s608 + $0xc0] sm:$0xff]
      %v634 = vld [vmem:[%s608 + $0xc8] sm:$0xff]
      %v635 = vld [vmem:[%s608 + $0xd0] sm:$0xff]
      %v636 = vld [vmem:[%s608 + $0xd8] sm:$0xff]
      %v637 = vld [vmem:[%s608 + $0xe0] sm:$0xff]
      %v638 = vld [vmem:[%s608 + $0xe8] sm:$0xff]
      %v639 = vld [vmem:[%s608 + $0xf0] sm:$0xff]
      %v640 = vld [vmem:[%s608 + $0xf8] sm:$0xff]
      %v641 = vld [vmem:[%s608 + $0x100] sm:$0xff]
      %v642 = vld [vmem:[%s608 + $0x108] sm:$0xff]
      %v643 = vld [vmem:[%s608 + $0x110] sm:$0xff]
      %v644 = vld [vmem:[%s608 + $0x118] sm:$0xff]
      %v645 = vld [vmem:[%s608 + $0x120] sm:$0xff]
      %v646 = vld [vmem:[%s608 + $0x128] sm:$0xff]
      %v647 = vld [vmem:[%s608 + $0x130] sm:$0xff]
      %v648 = vld [vmem:[%s608 + $0x138] sm:$0xff]
      %v649 = vld [vmem:[%s608 + $0x140] sm:$0xff]
      %v650 = vld [vmem:[%s608 + $0x148] sm:$0xff]
      %v651 = vld [vmem:[%s608 + $0x150] sm:$0xff]
      %v652 = vld [vmem:[%s608 + $0x158] sm:$0xff]
      %v653 = vld [vmem:[%s608 + $0x160] sm:$0xff]
      %v654 = vld [vmem:[%s608 + $0x168] sm:$0xff]
      %v655 = vld [vmem:[%s608 + $0x170] sm:$0xff]
      %v656 = vld [vmem:[%s608 + $0x178] sm:$0xff]
      %657 = vmatprep.subr.mxu0 0.0
      %658 = vmatpush1.msra.mxu0 %v624
      %659 = vmatprep.subr.mxu0 0.0
      %660 = vmatpush1.msra.mxu0 %v623
      %661 = vmatprep.subr.mxu0 0.0
      %662 = vmatpush1.msra.mxu0 %v622
      %663 = vmatprep.subr.mxu0 0.0
      %664 = vmatpush1.msra.mxu0 %v621
      %665 = vmatprep.subr.mxu0 0.0
      %666 = vmatpush1.msra.mxu0 %v620
      %667 = vmatprep.subr.mxu0 0.0
      %668 = vmatpush1.msra.mxu0 %v619
      %669 = vmatprep.subr.mxu0 0.0
      %670 = vmatpush1.msra.mxu0 %v618
      %671 = vmatprep.subr.mxu0 0.0
      %672 = vmatpush1.msra.mxu0 %v617
      %673 = vmatprep.subr.mxu0 0.0
      %674 = vmatpush1.msra.mxu0 %v616
      %675 = vmatprep.subr.mxu0 0.0
      %676 = vmatpush1.msra.mxu0 %v615
      %677 = vmatprep.subr.mxu0 0.0
      %678 = vmatpush1.msra.mxu0 %v614
      %679 = vmatprep.subr.mxu0 0.0
      %680 = vmatpush1.msra.mxu0 %v613
      %681 = vmatprep.subr.mxu0 0.0
      %682 = vmatpush1.msra.mxu0 %v612
      %683 = vmatprep.subr.mxu0 0.0
      %684 = vmatpush1.msra.mxu0 %v611
      %685 = vmatprep.subr.mxu0 0.0
      %686 = vmatpush1.msra.mxu0 %v610
      %687 = vmatprep.subr.mxu0 0.0
      %688 = vmatpush1.msra.mxu0 %v609
      %689 = vmatprep.subr.mxu0 0.0
      %690 = vmatpush2.msra.mxu0 %v640
      %691 = vmatprep.subr.mxu0 0.0
      %692 = vmatpush2.msra.mxu0 %v639
      %693 = vmatprep.subr.mxu0 0.0
      %694 = vmatpush2.msra.mxu0 %v638
      %695 = vmatprep.subr.mxu0 0.0
      %696 = vmatpush2.msra.mxu0 %v637
      %697 = vmatprep.subr.mxu0 0.0
      %698 = vmatpush2.msra.mxu0 %v636
      %699 = vmatprep.subr.mxu0 0.0
      %700 = vmatpush2.msra.mxu0 %v635
      %701 = vmatprep.subr.mxu0 0.0
      %702 = vmatpush2.msra.mxu0 %v634
      %703 = vmatprep.subr.mxu0 0.0
      %704 = vmatpush2.msra.mxu0 %v633
      %705 = vmatprep.subr.mxu0 0.0
      %706 = vmatpush2.msra.mxu0 %v632
      %707 = vmatprep.subr.mxu0 0.0
      %708 = vmatpush2.msra.mxu0 %v631
      %709 = vmatprep.subr.mxu0 0.0
      %710 = vmatpush2.msra.mxu0 %v630
      %711 = vmatprep.subr.mxu0 0.0
      %712 = vmatpush2.msra.mxu0 %v629
      %713 = vmatprep.subr.mxu0 0.0
      %714 = vmatpush2.msra.mxu0 %v628
      %715 = vmatprep.subr.mxu0 0.0
      %716 = vmatpush2.msra.mxu0 %v627
      %717 = vmatprep.subr.mxu0 0.0
      %718 = vmatpush2.msra.mxu0 %v626
      %719 = vmatprep.subr.mxu0 0.0
      %720 = vmatpush2.msra.mxu0 %v625
      %721 = vmatprep.mubr.f32.mxu0 %v585
      %722 = vmatmul.mubr.f32.gmra.mxu0 %v584
      %v723 = vpop.f32.mrf.mxu0
      %v724 = vadd.f32 0.0, %v723
      %v725 = vpop.f32.mrf.mxu0
      %726 = vmatprep.mubr.f32.mxu0 %v588
      %727 = vmatmul.mubr.f32.gmra.mxu0 %v587
      %v728 = vpop.f32.mrf.mxu0
      %v729 = vadd.f32 0.0, %v728
      %v730 = vpop.f32.mrf.mxu0
      %731 = vmatprep.mubr.f32.mxu0 %v591
      %732 = vmatmul.mubr.f32.gmra.mxu0 %v590
      %v733 = vpop.f32.mrf.mxu0
      %v734 = vadd.f32 0.0, %v733
      %v735 = vpop.f32.mrf.mxu0
      %736 = vmatprep.mubr.f32.mxu0 %v594
      %737 = vmatmul.mubr.f32.gmra.mxu0 %v593
      %v738 = vpop.f32.mrf.mxu0
      %v739 = vadd.f32 0.0, %v738
      %v740 = vpop.f32.mrf.mxu0
      %741 = vmatprep.mubr.f32.mxu0 %v597
      %742 = vmatmul.mubr.f32.gmra.mxu0 %v596
      %v743 = vpop.f32.mrf.mxu0
      %v744 = vadd.f32 0.0, %v743
      %v745 = vpop.f32.mrf.mxu0
      %746 = vmatprep.mubr.f32.mxu0 %v600
      %747 = vmatmul.mubr.f32.gmra.mxu0 %v599
      %v748 = vpop.f32.mrf.mxu0
      %v749 = vadd.f32 0.0, %v748
      %v750 = vpop.f32.mrf.mxu0
      %751 = vmatprep.mubr.f32.mxu0 %v603
      %752 = vmatmul.mubr.f32.gmra.mxu0 %v602
      %v753 = vpop.f32.mrf.mxu0
      %v754 = vadd.f32 0.0, %v753
      %v755 = vpop.f32.mrf.mxu0
      %756 = vmatprep.mubr.f32.mxu0 %v606
      %757 = vmatmul.mubr.f32.gmra.mxu0 %v605
      %v758 = vpop.f32.mrf.mxu0
      %v759 = vadd.f32 0.0, %v758
      %v760 = vpop.f32.mrf.mxu0
      %761 = vdwg.mxu0
      %762 = vmatprep.subr.mxu0 0.0
      %763 = vmatpush1.msra.mxu0 %v656
      %764 = vmatprep.subr.mxu0 0.0
      %765 = vmatpush1.msra.mxu0 %v655
      %766 = vmatprep.subr.mxu0 0.0
      %767 = vmatpush1.msra.mxu0 %v654
      %768 = vmatprep.subr.mxu0 0.0
      %769 = vmatpush1.msra.mxu0 %v653
      %770 = vmatprep.subr.mxu0 0.0
      %771 = vmatpush1.msra.mxu0 %v652
      %772 = vmatprep.subr.mxu0 0.0
      %773 = vmatpush1.msra.mxu0 %v651
      %774 = vmatprep.subr.mxu0 0.0
      %775 = vmatpush1.msra.mxu0 %v650
      %776 = vmatprep.subr.mxu0 0.0
      %777 = vmatpush1.msra.mxu0 %v649
      %778 = vmatprep.subr.mxu0 0.0
      %779 = vmatpush1.msra.mxu0 %v648
      %780 = vmatprep.subr.mxu0 0.0
      %781 = vmatpush1.msra.mxu0 %v647
      %782 = vmatprep.subr.mxu0 0.0
      %783 = vmatpush1.msra.mxu0 %v646
      %784 = vmatprep.subr.mxu0 0.0
      %785 = vmatpush1.msra.mxu0 %v645
      %786 = vmatprep.subr.mxu0 0.0
      %787 = vmatpush1.msra.mxu0 %v644
      %788 = vmatprep.subr.mxu0 0.0
      %789 = vmatpush1.msra.mxu0 %v643
      %790 = vmatprep.subr.mxu0 0.0
      %791 = vmatpush1.msra.mxu0 %v642
      %792 = vmatprep.subr.mxu0 0.0
      %793 = vmatpush1.msra.mxu0 %v641
      %794 = vmatprep.subr.mxu0 0.0
      %795 = vmatpush2.msra.mxu0 0.0
      %796 = vmatprep.subr.mxu0 0.0
      %797 = vmatpush2.msra.mxu0 0.0
      %798 = vmatprep.subr.mxu0 0.0
      %799 = vmatpush2.msra.mxu0 0.0
      %800 = vmatprep.subr.mxu0 0.0
      %801 = vmatpush2.msra.mxu0 0.0
      %802 = vmatprep.subr.mxu0 0.0
      %803 = vmatpush2.msra.mxu0 0.0
      %804 = vmatprep.subr.mxu0 0.0
      %805 = vmatpush2.msra.mxu0 0.0
      %806 = vmatprep.subr.mxu0 0.0
      %807 = vmatpush2.msra.mxu0 0.0
      %808 = vmatprep.subr.mxu0 0.0
      %809 = vmatpush2.msra.mxu0 0.0
      %810 = vmatprep.subr.mxu0 0.0
      %811 = vmatpush2.msra.mxu0 0.0
      %812 = vmatprep.subr.mxu0 0.0
      %813 = vmatpush2.msra.mxu0 0.0
      %814 = vmatprep.subr.mxu0 0.0
      %815 = vmatpush2.msra.mxu0 0.0
      %816 = vmatprep.subr.mxu0 0.0
      %817 = vmatpush2.msra.mxu0 0.0
      %818 = vmatprep.subr.mxu0 0.0
      %819 = vmatpush2.msra.mxu0 0.0
      %820 = vmatprep.subr.mxu0 0.0
      %821 = vmatpush2.msra.mxu0 0.0
      %822 = vmatprep.subr.mxu0 0.0
      %823 = vmatpush2.msra.mxu0 0.0
      %824 = vmatprep.subr.mxu0 0.0
      %825 = vmatpush2.msra.mxu0 0.0
      %826 = vmatprep.mubr.f32.mxu0 0.0
      %827 = vmatmul.mubr.f32.gmra.mxu0 %v586
      %v828 = vpop.f32.mrf.mxu0
      %v829 = vadd.f32 %v724, %v828
      %v830 = vpop.f32.mrf.mxu0
      %831 = vmatprep.mubr.f32.mxu0 0.0
      %832 = vmatmul.mubr.f32.gmra.mxu0 %v589
      %v833 = vpop.f32.mrf.mxu0
      %v834 = vadd.f32 %v729, %v833
      %v835 = vpop.f32.mrf.mxu0
      %836 = vmatprep.mubr.f32.mxu0 0.0
      %837 = vmatmul.mubr.f32.gmra.mxu0 %v592
      %v838 = vpop.f32.mrf.mxu0
      %v839 = vadd.f32 %v734, %v838
      %v840 = vpop.f32.mrf.mxu0
      %841 = vmatprep.mubr.f32.mxu0 0.0
      %842 = vmatmul.mubr.f32.gmra.mxu0 %v595
      %v843 = vpop.f32.mrf.mxu0
      %v844 = vadd.f32 %v739, %v843
      %v845 = vpop.f32.mrf.mxu0
      %846 = vmatprep.mubr.f32.mxu0 0.0
      %847 = vmatmul.mubr.f32.gmra.mxu0 %v598
      %v848 = vpop.f32.mrf.mxu0
      %v849 = vadd.f32 %v744, %v848
      %v850 = vpop.f32.mrf.mxu0
      %851 = vmatprep.mubr.f32.mxu0 0.0
      %852 = vmatmul.mubr.f32.gmra.mxu0 %v601
      %v853 = vpop.f32.mrf.mxu0
      %v854 = vadd.f32 %v749, %v853
      %v855 = vpop.f32.mrf.mxu0
      %856 = vmatprep.mubr.f32.mxu0 0.0
      %857 = vmatmul.mubr.f32.gmra.mxu0 %v604
      %v858 = vpop.f32.mrf.mxu0
      %v859 = vadd.f32 %v754, %v858
      %v860 = vpop.f32.mrf.mxu0
      %861 = vmatprep.mubr.f32.mxu0 0.0
      %862 = vmatmul.mubr.f32.gmra.mxu0 %v607
      %v863 = vpop.f32.mrf.mxu0
      %v864 = vadd.f32 %v759, %v863
      %v865 = vpop.f32.mrf.mxu0
      %866 = vdwg.mxu0
      %867 = vmatprep.subr.mxu0 0.0
      %868 = vmatpush1.msra.mxu0 %v503
      %869 = vmatprep.subr.mxu0 0.0
      %870 = vmatpush1.msra.mxu0 %v502
      %871 = vmatprep.subr.mxu0 0.0
      %872 = vmatpush1.msra.mxu0 %v501
      %873 = vmatprep.subr.mxu0 0.0
      %874 = vmatpush1.msra.mxu0 %v500
      %875 = vmatprep.subr.mxu0 0.0
      %876 = vmatpush1.msra.mxu0 %v499
      %877 = vmatprep.subr.mxu0 0.0
      %878 = vmatpush1.msra.mxu0 %v498
      %879 = vmatprep.subr.mxu0 0.0
      %880 = vmatpush1.msra.mxu0 %v497
      %881 = vmatprep.subr.mxu0 0.0
      %882 = vmatpush1.msra.mxu0 %v496
      %883 = vmatprep.subr.mxu0 0.0
      %884 = vmatpush1.msra.mxu0 %v495
      %885 = vmatprep.subr.mxu0 0.0
      %886 = vmatpush1.msra.mxu0 %v494
      %887 = vmatprep.subr.mxu0 0.0
      %888 = vmatpush1.msra.mxu0 %v493
      %889 = vmatprep.subr.mxu0 0.0
      %890 = vmatpush1.msra.mxu0 %v492
      %891 = vmatprep.subr.mxu0 0.0
      %892 = vmatpush1.msra.mxu0 %v491
      %893 = vmatprep.subr.mxu0 0.0
      %894 = vmatpush1.msra.mxu0 %v490
      %895 = vmatprep.subr.mxu0 0.0
      %896 = vmatpush1.msra.mxu0 %v489
      %897 = vmatprep.subr.mxu0 0.0
      %898 = vmatpush1.msra.mxu0 %v488
      %899 = vmatprep.subr.mxu0 0.0
      %900 = vmatpush2.msra.mxu0 %v519
      %901 = vmatprep.subr.mxu0 0.0
      %902 = vmatpush2.msra.mxu0 %v518
      %903 = vmatprep.subr.mxu0 0.0
      %904 = vmatpush2.msra.mxu0 %v517
      %905 = vmatprep.subr.mxu0 0.0
      %906 = vmatpush2.msra.mxu0 %v516
      %907 = vmatprep.subr.mxu0 0.0
      %908 = vmatpush2.msra.mxu0 %v515
      %909 = vmatprep.subr.mxu0 0.0
      %910 = vmatpush2.msra.mxu0 %v514
      %911 = vmatprep.subr.mxu0 0.0
      %912 = vmatpush2.msra.mxu0 %v513
      %913 = vmatprep.subr.mxu0 0.0
      %914 = vmatpush2.msra.mxu0 %v512
      %915 = vmatprep.subr.mxu0 0.0
      %916 = vmatpush2.msra.mxu0 %v511
      %917 = vmatprep.subr.mxu0 0.0
      %918 = vmatpush2.msra.mxu0 %v510
      %919 = vmatprep.subr.mxu0 0.0
      %920 = vmatpush2.msra.mxu0 %v509
      %921 = vmatprep.subr.mxu0 0.0
      %922 = vmatpush2.msra.mxu0 %v508
      %923 = vmatprep.subr.mxu0 0.0
      %924 = vmatpush2.msra.mxu0 %v507
      %925 = vmatprep.subr.mxu0 0.0
      %926 = vmatpush2.msra.mxu0 %v506
      %927 = vmatprep.subr.mxu0 0.0
      %928 = vmatpush2.msra.mxu0 %v505
      %929 = vmatprep.subr.mxu0 0.0
      %930 = vmatpush2.msra.mxu0 %v504
      %931 = vmatprep.mubr.f32.mxu0 %v465
      %932 = vmatmul.mubr.f32.gmra.mxu0 %v464
      %v933 = vpop.f32.mrf.mxu0
      %v934 = vadd.f32 %v829, %v933
      %v935 = vpop.f32.mrf.mxu0
      %936 = vmatprep.mubr.f32.mxu0 %v468
      %937 = vmatmul.mubr.f32.gmra.mxu0 %v467
      %v938 = vpop.f32.mrf.mxu0
      %v939 = vadd.f32 %v834, %v938
      %v940 = vpop.f32.mrf.mxu0
      %941 = vmatprep.mubr.f32.mxu0 %v471
      %942 = vmatmul.mubr.f32.gmra.mxu0 %v470
      %v943 = vpop.f32.mrf.mxu0
      %v944 = vadd.f32 %v839, %v943
      %v945 = vpop.f32.mrf.mxu0
      %946 = vmatprep.mubr.f32.mxu0 %v474
      %947 = vmatmul.mubr.f32.gmra.mxu0 %v473
      %v948 = vpop.f32.mrf.mxu0
      %v949 = vadd.f32 %v844, %v948
      %v950 = vpop.f32.mrf.mxu0
      %951 = vmatprep.mubr.f32.mxu0 %v477
      %952 = vmatmul.mubr.f32.gmra.mxu0 %v476
      %v953 = vpop.f32.mrf.mxu0
      %v954 = vadd.f32 %v849, %v953
      %v955 = vpop.f32.mrf.mxu0
      %956 = vmatprep.mubr.f32.mxu0 %v480
      %957 = vmatmul.mubr.f32.gmra.mxu0 %v479
      %v958 = vpop.f32.mrf.mxu0
      %v959 = vadd.f32 %v854, %v958
      %v960 = vpop.f32.mrf.mxu0
      %961 = vmatprep.mubr.f32.mxu0 %v483
      %962 = vmatmul.mubr.f32.gmra.mxu0 %v482
      %v963 = vpop.f32.mrf.mxu0
      %v964 = vadd.f32 %v859, %v963
      %v965 = vpop.f32.mrf.mxu0
      %966 = vmatprep.mubr.f32.mxu0 %v486
      %967 = vmatmul.mubr.f32.gmra.mxu0 %v485
      %v968 = vpop.f32.mrf.mxu0
      %v969 = vadd.f32 %v864, %v968
      %v970 = vpop.f32.mrf.mxu0
      %971 = vdwg.mxu0
      %972 = vmatprep.subr.mxu0 0.0
      %973 = vmatpush1.msra.mxu0 %v535
      %974 = vmatprep.subr.mxu0 0.0
      %975 = vmatpush1.msra.mxu0 %v534
      %976 = vmatprep.subr.mxu0 0.0
      %977 = vmatpush1.msra.mxu0 %v533
      %978 = vmatprep.subr.mxu0 0.0
      %979 = vmatpush1.msra.mxu0 %v532
      %980 = vmatprep.subr.mxu0 0.0
      %981 = vmatpush1.msra.mxu0 %v531
      %982 = vmatprep.subr.mxu0 0.0
      %983 = vmatpush1.msra.mxu0 %v530
      %984 = vmatprep.subr.mxu0 0.0
      %985 = vmatpush1.msra.mxu0 %v529
      %986 = vmatprep.subr.mxu0 0.0
      %987 = vmatpush1.msra.mxu0 %v528
      %988 = vmatprep.subr.mxu0 0.0
      %989 = vmatpush1.msra.mxu0 %v527
      %990 = vmatprep.subr.mxu0 0.0
      %991 = vmatpush1.msra.mxu0 %v526
      %992 = vmatprep.subr.mxu0 0.0
      %993 = vmatpush1.msra.mxu0 %v525
      %994 = vmatprep.subr.mxu0 0.0
      %995 = vmatpush1.msra.mxu0 %v524
      %996 = vmatprep.subr.mxu0 0.0
      %997 = vmatpush1.msra.mxu0 %v523
      %998 = vmatprep.subr.mxu0 0.0
      %999 = vmatpush1.msra.mxu0 %v522
      %1000 = vmatprep.subr.mxu0 0.0
      %1001 = vmatpush1.msra.mxu0 %v521
      %1002 = vmatprep.subr.mxu0 0.0
      %1003 = vmatpush1.msra.mxu0 %v520
      %1004 = vmatprep.subr.mxu0 0.0
      %1005 = vmatpush2.msra.mxu0 0.0
      %1006 = vmatprep.subr.mxu0 0.0
      %1007 = vmatpush2.msra.mxu0 0.0
      %1008 = vmatprep.subr.mxu0 0.0
      %1009 = vmatpush2.msra.mxu0 0.0
      %1010 = vmatprep.subr.mxu0 0.0
      %1011 = vmatpush2.msra.mxu0 0.0
      %1012 = vmatprep.subr.mxu0 0.0
      %1013 = vmatpush2.msra.mxu0 0.0
      %1014 = vmatprep.subr.mxu0 0.0
      %1015 = vmatpush2.msra.mxu0 0.0
      %1016 = vmatprep.subr.mxu0 0.0
      %1017 = vmatpush2.msra.mxu0 0.0
      %1018 = vmatprep.subr.mxu0 0.0
      %1019 = vmatpush2.msra.mxu0 0.0
      %1020 = vmatprep.subr.mxu0 0.0
      %1021 = vmatpush2.msra.mxu0 0.0
      %1022 = vmatprep.subr.mxu0 0.0
      %1023 = vmatpush2.msra.mxu0 0.0
      %1024 = vmatprep.subr.mxu0 0.0
      %1025 = vmatpush2.msra.mxu0 0.0
      %1026 = vmatprep.subr.mxu0 0.0
      %1027 = vmatpush2.msra.mxu0 0.0
      %1028 = vmatprep.subr.mxu0 0.0
      %1029 = vmatpush2.msra.mxu0 0.0
      %1030 = vmatprep.subr.mxu0 0.0
      %1031 = vmatpush2.msra.mxu0 0.0
      %1032 = vmatprep.subr.mxu0 0.0
      %1033 = vmatpush2.msra.mxu0 0.0
      %1034 = vmatprep.subr.mxu0 0.0
      %1035 = vmatpush2.msra.mxu0 0.0
      %1036 = vmatprep.mubr.f32.mxu0 0.0
      %1037 = vmatmul.mubr.f32.gmra.mxu0 %v466
      %v1038 = vpop.f32.mrf.mxu0
      %v1039 = vadd.f32 %v934, %v1038
      %v1040 = vpop.f32.mrf.mxu0
      %1041 = vmatprep.mubr.f32.mxu0 0.0
      %1042 = vmatmul.mubr.f32.gmra.mxu0 %v469
      %v1043 = vpop.f32.mrf.mxu0
      %v1044 = vadd.f32 %v939, %v1043
      %v1045 = vpop.f32.mrf.mxu0
      %1046 = vmatprep.mubr.f32.mxu0 0.0
      %1047 = vmatmul.mubr.f32.gmra.mxu0 %v472
      %v1048 = vpop.f32.mrf.mxu0
      %v1049 = vadd.f32 %v944, %v1048
      %v1050 = vpop.f32.mrf.mxu0
      %1051 = vmatprep.mubr.f32.mxu0 0.0
      %1052 = vmatmul.mubr.f32.gmra.mxu0 %v475
      %v1053 = vpop.f32.mrf.mxu0
      %v1054 = vadd.f32 %v949, %v1053
      %v1055 = vpop.f32.mrf.mxu0
      %1056 = vmatprep.mubr.f32.mxu0 0.0
      %1057 = vmatmul.mubr.f32.gmra.mxu0 %v478
      %v1058 = vpop.f32.mrf.mxu0
      %v1059 = vadd.f32 %v954, %v1058
      %v1060 = vpop.f32.mrf.mxu0
      %1061 = vmatprep.mubr.f32.mxu0 0.0
      %1062 = vmatmul.mubr.f32.gmra.mxu0 %v481
      %v1063 = vpop.f32.mrf.mxu0
      %v1064 = vadd.f32 %v959, %v1063
      %v1065 = vpop.f32.mrf.mxu0
      %1066 = vmatprep.mubr.f32.mxu0 0.0
      %1067 = vmatmul.mubr.f32.gmra.mxu0 %v484
      %v1068 = vpop.f32.mrf.mxu0
      %v1069 = vadd.f32 %v964, %v1068
      %v1070 = vpop.f32.mrf.mxu0
      %1071 = vmatprep.mubr.f32.mxu0 0.0
      %1072 = vmatmul.mubr.f32.gmra.mxu0 %v487
      %v1073 = vpop.f32.mrf.mxu0
      %v1074 = vadd.f32 %v969, %v1073
      %v1075 = vpop.f32.mrf.mxu0
      %1076 = vdwg.mxu0
      %s1077 = scalar_lea.vmem [#allocation2], 32
      %v1078 = vld [vmem:[%s1077] sm:$0xff]
      %v1079 = vld [vmem:[%s1077 + $0x10] sm:$0xff]
      %v1080 = vld [vmem:[%s1077 + $0x20] sm:$0xff]
      %v1081 = vld [vmem:[%s1077 + $0x30] sm:$0xff]
      %v1082 = vld [vmem:[%s1077 + $0x40] sm:$0xff]
      %v1083 = vld [vmem:[%s1077 + $0x50] sm:$0xff]
      %v1084 = vld [vmem:[%s1077 + $0x60] sm:$0xff]
      %v1085 = vld [vmem:[%s1077 + $0x70] sm:$0xff]
      %1086 = vst [vmem:[#allocation3] sm:$0xff] %v1078
      %1087 = vst [vmem:[#allocation3 + $0x18] sm:$0xff] %v1079
      %1088 = vst [vmem:[#allocation3 + $0x30] sm:$0xff] %v1080
      %1089 = vst [vmem:[#allocation3 + $0x48] sm:$0xff] %v1081
      %1090 = vst [vmem:[#allocation3 + $0x60] sm:$0xff] %v1082
      %1091 = vst [vmem:[#allocation3 + $0x78] sm:$0xff] %v1083
      %1092 = vst [vmem:[#allocation3 + $0x90] sm:$0xff] %v1084
      %1093 = vst [vmem:[#allocation3 + $0xa8] sm:$0xff] %v1085
      %v1094 = vld [vmem:[%s1077 + $0x1] sm:$0xff]
      %v1095 = vld [vmem:[%s1077 + $0x11] sm:$0xff]
      %v1096 = vld [vmem:[%s1077 + $0x21] sm:$0xff]
      %v1097 = vld [vmem:[%s1077 + $0x31] sm:$0xff]
      %v1098 = vld [vmem:[%s1077 + $0x41] sm:$0xff]
      %v1099 = vld [vmem:[%s1077 + $0x51] sm:$0xff]
      %v1100 = vld [vmem:[%s1077 + $0x61] sm:$0xff]
      %v1101 = vld [vmem:[%s1077 + $0x71] sm:$0xff]
      %1102 = vst [vmem:[#allocation3 + $0x8] sm:$0xff] %v1094
      %1103 = vst [vmem:[#allocation3 + $0x20] sm:$0xff] %v1095
      %1104 = vst [vmem:[#allocation3 + $0x38] sm:$0xff] %v1096
      %1105 = vst [vmem:[#allocation3 + $0x50] sm:$0xff] %v1097
      %1106 = vst [vmem:[#allocation3 + $0x68] sm:$0xff] %v1098
      %1107 = vst [vmem:[#allocation3 + $0x80] sm:$0xff] %v1099
      %1108 = vst [vmem:[#allocation3 + $0x98] sm:$0xff] %v1100
      %1109 = vst [vmem:[#allocation3 + $0xb0] sm:$0xff] %v1101
      %v1110 = vld [vmem:[%s1077 + $0x2] sm:$0xff]
      %v1111 = vld [vmem:[%s1077 + $0x12] sm:$0xff]
      %v1112 = vld [vmem:[%s1077 + $0x22] sm:$0xff]
      %v1113 = vld [vmem:[%s1077 + $0x32] sm:$0xff]
      %v1114 = vld [vmem:[%s1077 + $0x42] sm:$0xff]
      %v1115 = vld [vmem:[%s1077 + $0x52] sm:$0xff]
      %v1116 = vld [vmem:[%s1077 + $0x62] sm:$0xff]
      %v1117 = vld [vmem:[%s1077 + $0x72] sm:$0xff]
      %1118 = vst [vmem:[#allocation3 + $0x10] sm:$0xff] %v1110
      %1119 = vst [vmem:[#allocation3 + $0x28] sm:$0xff] %v1111
      %1120 = vst [vmem:[#allocation3 + $0x40] sm:$0xff] %v1112
      %1121 = vst [vmem:[#allocation3 + $0x58] sm:$0xff] %v1113
      %1122 = vst [vmem:[#allocation3 + $0x70] sm:$0xff] %v1114
      %1123 = vst [vmem:[#allocation3 + $0x88] sm:$0xff] %v1115
      %1124 = vst [vmem:[#allocation3 + $0xa0] sm:$0xff] %v1116
      %1125 = vst [vmem:[#allocation3 + $0xb8] sm:$0xff] %v1117
      %v1126 = vld [vmem:[#allocation3] sm:$0xff]
      %v1127 = vld [vmem:[#allocation3 + $0x8] sm:$0xff]
      %v1128 = vld [vmem:[#allocation3 + $0x10] sm:$0xff]
      %v1129 = vld [vmem:[#allocation3 + $0x18] sm:$0xff]
      %v1130 = vld [vmem:[#allocation3 + $0x20] sm:$0xff]
      %v1131 = vld [vmem:[#allocation3 + $0x28] sm:$0xff]
      %v1132 = vld [vmem:[#allocation3 + $0x30] sm:$0xff]
      %v1133 = vld [vmem:[#allocation3 + $0x38] sm:$0xff]
      %v1134 = vld [vmem:[#allocation3 + $0x40] sm:$0xff]
      %v1135 = vld [vmem:[#allocation3 + $0x48] sm:$0xff]
      %v1136 = vld [vmem:[#allocation3 + $0x50] sm:$0xff]
      %v1137 = vld [vmem:[#allocation3 + $0x58] sm:$0xff]
      %v1138 = vld [vmem:[#allocation3 + $0x60] sm:$0xff]
      %v1139 = vld [vmem:[#allocation3 + $0x68] sm:$0xff]
      %v1140 = vld [vmem:[#allocation3 + $0x70] sm:$0xff]
      %v1141 = vld [vmem:[#allocation3 + $0x78] sm:$0xff]
      %v1142 = vld [vmem:[#allocation3 + $0x80] sm:$0xff]
      %v1143 = vld [vmem:[#allocation3 + $0x88] sm:$0xff]
      %v1144 = vld [vmem:[#allocation3 + $0x90] sm:$0xff]
      %v1145 = vld [vmem:[#allocation3 + $0x98] sm:$0xff]
      %v1146 = vld [vmem:[#allocation3 + $0xa0] sm:$0xff]
      %v1147 = vld [vmem:[#allocation3 + $0xa8] sm:$0xff]
      %v1148 = vld [vmem:[#allocation3 + $0xb0] sm:$0xff]
      %v1149 = vld [vmem:[#allocation3 + $0xb8] sm:$0xff]
      %s1150 = scalar_lea.vmem %s2, 768
      %v1151 = vld [vmem:[%s1150] sm:$0xff]
      %v1152 = vld [vmem:[%s1150 + $0x8] sm:$0xff]
      %v1153 = vld [vmem:[%s1150 + $0x10] sm:$0xff]
      %v1154 = vld [vmem:[%s1150 + $0x18] sm:$0xff]
      %v1155 = vld [vmem:[%s1150 + $0x20] sm:$0xff]
      %v1156 = vld [vmem:[%s1150 + $0x28] sm:$0xff]
      %v1157 = vld [vmem:[%s1150 + $0x30] sm:$0xff]
      %v1158 = vld [vmem:[%s1150 + $0x38] sm:$0xff]
      %v1159 = vld [vmem:[%s1150 + $0x40] sm:$0xff]
      %v1160 = vld [vmem:[%s1150 + $0x48] sm:$0xff]
      %v1161 = vld [vmem:[%s1150 + $0x50] sm:$0xff]
      %v1162 = vld [vmem:[%s1150 + $0x58] sm:$0xff]
      %v1163 = vld [vmem:[%s1150 + $0x60] sm:$0xff]
      %v1164 = vld [vmem:[%s1150 + $0x68] sm:$0xff]
      %v1165 = vld [vmem:[%s1150 + $0x70] sm:$0xff]
      %v1166 = vld [vmem:[%s1150 + $0x78] sm:$0xff]
      %v1167 = vld [vmem:[%s1150 + $0x80] sm:$0xff]
      %v1168 = vld [vmem:[%s1150 + $0x88] sm:$0xff]
      %v1169 = vld [vmem:[%s1150 + $0x90] sm:$0xff]
      %v1170 = vld [vmem:[%s1150 + $0x98] sm:$0xff]
      %v1171 = vld [vmem:[%s1150 + $0xa0] sm:$0xff]
      %v1172 = vld [vmem:[%s1150 + $0xa8] sm:$0xff]
      %v1173 = vld [vmem:[%s1150 + $0xb0] sm:$0xff]
      %v1174 = vld [vmem:[%s1150 + $0xb8] sm:$0xff]
      %v1175 = vld [vmem:[%s1150 + $0xc0] sm:$0xff]
      %v1176 = vld [vmem:[%s1150 + $0xc8] sm:$0xff]
      %v1177 = vld [vmem:[%s1150 + $0xd0] sm:$0xff]
      %v1178 = vld [vmem:[%s1150 + $0xd8] sm:$0xff]
      %v1179 = vld [vmem:[%s1150 + $0xe0] sm:$0xff]
      %v1180 = vld [vmem:[%s1150 + $0xe8] sm:$0xff]
      %v1181 = vld [vmem:[%s1150 + $0xf0] sm:$0xff]
      %v1182 = vld [vmem:[%s1150 + $0xf8] sm:$0xff]
      %v1183 = vld [vmem:[%s1150 + $0x100] sm:$0xff]
      %v1184 = vld [vmem:[%s1150 + $0x108] sm:$0xff]
      %v1185 = vld [vmem:[%s1150 + $0x110] sm:$0xff]
      %v1186 = vld [vmem:[%s1150 + $0x118] sm:$0xff]
      %v1187 = vld [vmem:[%s1150 + $0x120] sm:$0xff]
      %v1188 = vld [vmem:[%s1150 + $0x128] sm:$0xff]
      %v1189 = vld [vmem:[%s1150 + $0x130] sm:$0xff]
      %v1190 = vld [vmem:[%s1150 + $0x138] sm:$0xff]
      %v1191 = vld [vmem:[%s1150 + $0x140] sm:$0xff]
      %v1192 = vld [vmem:[%s1150 + $0x148] sm:$0xff]
      %v1193 = vld [vmem:[%s1150 + $0x150] sm:$0xff]
      %v1194 = vld [vmem:[%s1150 + $0x158] sm:$0xff]
      %v1195 = vld [vmem:[%s1150 + $0x160] sm:$0xff]
      %v1196 = vld [vmem:[%s1150 + $0x168] sm:$0xff]
      %v1197 = vld [vmem:[%s1150 + $0x170] sm:$0xff]
      %v1198 = vld [vmem:[%s1150 + $0x178] sm:$0xff]
      %1199 = vmatprep.subr.mxu0 0.0
      %1200 = vmatpush1.msra.mxu0 %v1166
      %1201 = vmatprep.subr.mxu0 0.0
      %1202 = vmatpush1.msra.mxu0 %v1165
      %1203 = vmatprep.subr.mxu0 0.0
      %1204 = vmatpush1.msra.mxu0 %v1164
      %1205 = vmatprep.subr.mxu0 0.0
      %1206 = vmatpush1.msra.mxu0 %v1163
      %1207 = vmatprep.subr.mxu0 0.0
      %1208 = vmatpush1.msra.mxu0 %v1162
      %1209 = vmatprep.subr.mxu0 0.0
      %1210 = vmatpush1.msra.mxu0 %v1161
      %1211 = vmatprep.subr.mxu0 0.0
      %1212 = vmatpush1.msra.mxu0 %v1160
      %1213 = vmatprep.subr.mxu0 0.0
      %1214 = vmatpush1.msra.mxu0 %v1159
      %1215 = vmatprep.subr.mxu0 0.0
      %1216 = vmatpush1.msra.mxu0 %v1158
      %1217 = vmatprep.subr.mxu0 0.0
      %1218 = vmatpush1.msra.mxu0 %v1157
      %1219 = vmatprep.subr.mxu0 0.0
      %1220 = vmatpush1.msra.mxu0 %v1156
      %1221 = vmatprep.subr.mxu0 0.0
      %1222 = vmatpush1.msra.mxu0 %v1155
      %1223 = vmatprep.subr.mxu0 0.0
      %1224 = vmatpush1.msra.mxu0 %v1154
      %1225 = vmatprep.subr.mxu0 0.0
      %1226 = vmatpush1.msra.mxu0 %v1153
      %1227 = vmatprep.subr.mxu0 0.0
      %1228 = vmatpush1.msra.mxu0 %v1152
      %1229 = vmatprep.subr.mxu0 0.0
      %1230 = vmatpush1.msra.mxu0 %v1151
      %1231 = vmatprep.subr.mxu0 0.0
      %1232 = vmatpush2.msra.mxu0 %v1182
      %1233 = vmatprep.subr.mxu0 0.0
      %1234 = vmatpush2.msra.mxu0 %v1181
      %1235 = vmatprep.subr.mxu0 0.0
      %1236 = vmatpush2.msra.mxu0 %v1180
      %1237 = vmatprep.subr.mxu0 0.0
      %1238 = vmatpush2.msra.mxu0 %v1179
      %1239 = vmatprep.subr.mxu0 0.0
      %1240 = vmatpush2.msra.mxu0 %v1178
      %1241 = vmatprep.subr.mxu0 0.0
      %1242 = vmatpush2.msra.mxu0 %v1177
      %1243 = vmatprep.subr.mxu0 0.0
      %1244 = vmatpush2.msra.mxu0 %v1176
      %1245 = vmatprep.subr.mxu0 0.0
      %1246 = vmatpush2.msra.mxu0 %v1175
      %1247 = vmatprep.subr.mxu0 0.0
      %1248 = vmatpush2.msra.mxu0 %v1174
      %1249 = vmatprep.subr.mxu0 0.0
      %1250 = vmatpush2.msra.mxu0 %v1173
      %1251 = vmatprep.subr.mxu0 0.0
      %1252 = vmatpush2.msra.mxu0 %v1172
      %1253 = vmatprep.subr.mxu0 0.0
      %1254 = vmatpush2.msra.mxu0 %v1171
      %1255 = vmatprep.subr.mxu0 0.0
      %1256 = vmatpush2.msra.mxu0 %v1170
      %1257 = vmatprep.subr.mxu0 0.0
      %1258 = vmatpush2.msra.mxu0 %v1169
      %1259 = vmatprep.subr.mxu0 0.0
      %1260 = vmatpush2.msra.mxu0 %v1168
      %1261 = vmatprep.subr.mxu0 0.0
      %1262 = vmatpush2.msra.mxu0 %v1167
      %1263 = vmatprep.mubr.f32.mxu0 %v1127
      %1264 = vmatmul.mubr.f32.gmra.mxu0 %v1126
      %v1265 = vpop.f32.mrf.mxu0
      %v1266 = vadd.f32 0.0, %v1265
      %v1267 = vpop.f32.mrf.mxu0
      %1268 = vmatprep.mubr.f32.mxu0 %v1130
      %1269 = vmatmul.mubr.f32.gmra.mxu0 %v1129
      %v1270 = vpop.f32.mrf.mxu0
      %v1271 = vadd.f32 0.0, %v1270
      %v1272 = vpop.f32.mrf.mxu0
      %1273 = vmatprep.mubr.f32.mxu0 %v1133
      %1274 = vmatmul.mubr.f32.gmra.mxu0 %v1132
      %v1275 = vpop.f32.mrf.mxu0
      %v1276 = vadd.f32 0.0, %v1275
      %v1277 = vpop.f32.mrf.mxu0
      %1278 = vmatprep.mubr.f32.mxu0 %v1136
      %1279 = vmatmul.mubr.f32.gmra.mxu0 %v1135
      %v1280 = vpop.f32.mrf.mxu0
      %v1281 = vadd.f32 0.0, %v1280
      %v1282 = vpop.f32.mrf.mxu0
      %1283 = vmatprep.mubr.f32.mxu0 %v1139
      %1284 = vmatmul.mubr.f32.gmra.mxu0 %v1138
      %v1285 = vpop.f32.mrf.mxu0
      %v1286 = vadd.f32 0.0, %v1285
      %v1287 = vpop.f32.mrf.mxu0
      %1288 = vmatprep.mubr.f32.mxu0 %v1142
      %1289 = vmatmul.mubr.f32.gmra.mxu0 %v1141
      %v1290 = vpop.f32.mrf.mxu0
      %v1291 = vadd.f32 0.0, %v1290
      %v1292 = vpop.f32.mrf.mxu0
      %1293 = vmatprep.mubr.f32.mxu0 %v1145
      %1294 = vmatmul.mubr.f32.gmra.mxu0 %v1144
      %v1295 = vpop.f32.mrf.mxu0
      %v1296 = vadd.f32 0.0, %v1295
      %v1297 = vpop.f32.mrf.mxu0
      %1298 = vmatprep.mubr.f32.mxu0 %v1148
      %1299 = vmatmul.mubr.f32.gmra.mxu0 %v1147
      %v1300 = vpop.f32.mrf.mxu0
      %v1301 = vadd.f32 0.0, %v1300
      %v1302 = vpop.f32.mrf.mxu0
      %1303 = vdwg.mxu0
      %1304 = vmatprep.subr.mxu0 0.0
      %1305 = vmatpush1.msra.mxu0 %v1198
      %1306 = vmatprep.subr.mxu0 0.0
      %1307 = vmatpush1.msra.mxu0 %v1197
      %1308 = vmatprep.subr.mxu0 0.0
      %1309 = vmatpush1.msra.mxu0 %v1196
      %1310 = vmatprep.subr.mxu0 0.0
      %1311 = vmatpush1.msra.mxu0 %v1195
      %1312 = vmatprep.subr.mxu0 0.0
      %1313 = vmatpush1.msra.mxu0 %v1194
      %1314 = vmatprep.subr.mxu0 0.0
      %1315 = vmatpush1.msra.mxu0 %v1193
      %1316 = vmatprep.subr.mxu0 0.0
      %1317 = vmatpush1.msra.mxu0 %v1192
      %1318 = vmatprep.subr.mxu0 0.0
      %1319 = vmatpush1.msra.mxu0 %v1191
      %1320 = vmatprep.subr.mxu0 0.0
      %1321 = vmatpush1.msra.mxu0 %v1190
      %1322 = vmatprep.subr.mxu0 0.0
      %1323 = vmatpush1.msra.mxu0 %v1189
      %1324 = vmatprep.subr.mxu0 0.0
      %1325 = vmatpush1.msra.mxu0 %v1188
      %1326 = vmatprep.subr.mxu0 0.0
      %1327 = vmatpush1.msra.mxu0 %v1187
      %1328 = vmatprep.subr.mxu0 0.0
      %1329 = vmatpush1.msra.mxu0 %v1186
      %1330 = vmatprep.subr.mxu0 0.0
      %1331 = vmatpush1.msra.mxu0 %v1185
      %1332 = vmatprep.subr.mxu0 0.0
      %1333 = vmatpush1.msra.mxu0 %v1184
      %1334 = vmatprep.subr.mxu0 0.0
      %1335 = vmatpush1.msra.mxu0 %v1183
      %1336 = vmatprep.subr.mxu0 0.0
      %1337 = vmatpush2.msra.mxu0 0.0
      %1338 = vmatprep.subr.mxu0 0.0
      %1339 = vmatpush2.msra.mxu0 0.0
      %1340 = vmatprep.subr.mxu0 0.0
      %1341 = vmatpush2.msra.mxu0 0.0
      %1342 = vmatprep.subr.mxu0 0.0
      %1343 = vmatpush2.msra.mxu0 0.0
      %1344 = vmatprep.subr.mxu0 0.0
      %1345 = vmatpush2.msra.mxu0 0.0
      %1346 = vmatprep.subr.mxu0 0.0
      %1347 = vmatpush2.msra.mxu0 0.0
      %1348 = vmatprep.subr.mxu0 0.0
      %1349 = vmatpush2.msra.mxu0 0.0
      %1350 = vmatprep.subr.mxu0 0.0
      %1351 = vmatpush2.msra.mxu0 0.0
      %1352 = vmatprep.subr.mxu0 0.0
      %1353 = vmatpush2.msra.mxu0 0.0
      %1354 = vmatprep.subr.mxu0 0.0
      %1355 = vmatpush2.msra.mxu0 0.0
      %1356 = vmatprep.subr.mxu0 0.0
      %1357 = vmatpush2.msra.mxu0 0.0
      %1358 = vmatprep.subr.mxu0 0.0
      %1359 = vmatpush2.msra.mxu0 0.0
      %1360 = vmatprep.subr.mxu0 0.0
      %1361 = vmatpush2.msra.mxu0 0.0
      %1362 = vmatprep.subr.mxu0 0.0
      %1363 = vmatpush2.msra.mxu0 0.0
      %1364 = vmatprep.subr.mxu0 0.0
      %1365 = vmatpush2.msra.mxu0 0.0
      %1366 = vmatprep.subr.mxu0 0.0
      %1367 = vmatpush2.msra.mxu0 0.0
      %1368 = vmatprep.mubr.f32.mxu0 0.0
      %1369 = vmatmul.mubr.f32.gmra.mxu0 %v1128
      %v1370 = vpop.f32.mrf.mxu0
      %v1371 = vadd.f32 %v1266, %v1370
      %v1372 = vpop.f32.mrf.mxu0
      %1373 = vmatprep.mubr.f32.mxu0 0.0
      %1374 = vmatmul.mubr.f32.gmra.mxu0 %v1131
      %v1375 = vpop.f32.mrf.mxu0
      %v1376 = vadd.f32 %v1271, %v1375
      %v1377 = vpop.f32.mrf.mxu0
      %1378 = vmatprep.mubr.f32.mxu0 0.0
      %1379 = vmatmul.mubr.f32.gmra.mxu0 %v1134
      %v1380 = vpop.f32.mrf.mxu0
      %v1381 = vadd.f32 %v1276, %v1380
      %v1382 = vpop.f32.mrf.mxu0
      %1383 = vmatprep.mubr.f32.mxu0 0.0
      %1384 = vmatmul.mubr.f32.gmra.mxu0 %v1137
      %v1385 = vpop.f32.mrf.mxu0
      %v1386 = vadd.f32 %v1281, %v1385
      %v1387 = vpop.f32.mrf.mxu0
      %1388 = vmatprep.mubr.f32.mxu0 0.0
      %1389 = vmatmul.mubr.f32.gmra.mxu0 %v1140
      %v1390 = vpop.f32.mrf.mxu0
      %v1391 = vadd.f32 %v1286, %v1390
      %v1392 = vpop.f32.mrf.mxu0
      %1393 = vmatprep.mubr.f32.mxu0 0.0
      %1394 = vmatmul.mubr.f32.gmra.mxu0 %v1143
      %v1395 = vpop.f32.mrf.mxu0
      %v1396 = vadd.f32 %v1291, %v1395
      %v1397 = vpop.f32.mrf.mxu0
      %1398 = vmatprep.mubr.f32.mxu0 0.0
      %1399 = vmatmul.mubr.f32.gmra.mxu0 %v1146
      %v1400 = vpop.f32.mrf.mxu0
      %v1401 = vadd.f32 %v1296, %v1400
      %v1402 = vpop.f32.mrf.mxu0
      %1403 = vmatprep.mubr.f32.mxu0 0.0
      %1404 = vmatmul.mubr.f32.gmra.mxu0 %v1149
      %v1405 = vpop.f32.mrf.mxu0
      %v1406 = vadd.f32 %v1301, %v1405
      %v1407 = vpop.f32.mrf.mxu0
      %1408 = vdwg.mxu0
      %v1409 = vadd.f32 %v1039, %v1371
      %v1410 = vadd.f32 %v1044, %v1376
      %v1411 = vadd.f32 %v1049, %v1381
      %v1412 = vadd.f32 %v1054, %v1386
      %v1413 = vadd.f32 %v1059, %v1391
      %v1414 = vadd.f32 %v1064, %v1396
      %v1415 = vadd.f32 %v1069, %v1401
      %v1416 = vadd.f32 %v1074, %v1406
      %v1417 = vadd.f32 %v1409, %v1410
      %v1418 = vadd.f32 %v1417, %v1411
      %v1419 = vadd.f32 %v1418, %v1412
      %v1420 = vadd.f32 %v1419, %v1413
      %v1421 = vadd.f32 %v1420, %v1414
      %v1422 = vadd.f32 %v1421, %v1415
      %v1423 = vadd.f32 %v1422, %v1416
      %v1424 = vrot.slane %v1423, 4
      %v1425 = vadd.f32 %v1423, %v1424
      %v1426 = vrot.slane %v1425, 2
      %v1427 = vadd.f32 %v1425, %v1426
      %v1428 = vrot.slane %v1427, 1
      %v1429 = vadd.f32 %v1427, %v1428
      %v1430 = vmul.f32 %v1429, 0.015625
      %v1431 = vmul.f32 %v1409, %v1409
      %v1432 = vmul.f32 %v1410, %v1410
      %v1433 = vmul.f32 %v1411, %v1411
      %v1434 = vmul.f32 %v1412, %v1412
      %v1435 = vmul.f32 %v1413, %v1413
      %v1436 = vmul.f32 %v1414, %v1414
      %v1437 = vmul.f32 %v1415, %v1415
      %v1438 = vmul.f32 %v1416, %v1416
      %v1439 = vadd.f32 %v1431, %v1432
      %v1440 = vadd.f32 %v1439, %v1433
      %v1441 = vadd.f32 %v1440, %v1434
      %v1442 = vadd.f32 %v1441, %v1435
      %v1443 = vadd.f32 %v1442, %v1436
      %v1444 = vadd.f32 %v1443, %v1437
      %v1445 = vadd.f32 %v1444, %v1438
      %v1446 = vrot.slane %v1445, 4
      %v1447 = vadd.f32 %v1445, %v1446
      %v1448 = vrot.slane %v1447, 2
      %v1449 = vadd.f32 %v1447, %v1448
      %v1450 = vrot.slane %v1449, 1
      %v1451 = vadd.f32 %v1449, %v1450
      %v1452 = vmul.f32 %v1451, 0.015625
      %v1453 = vmul.f32 %v1430, %v1430
      %v1454 = vsub.f32 %v1452, %v1453
      %v1455 = vmax.f32 %v1454, 0.0
      %v1456 = vadd.f32 %v1455, 1e-05
      %v1457 = vrsqrt.pop %v1456
      %v1458 = vmul.f32 %v1409, %v1457
      %v1459 = vmul.f32 %v1410, %v1457
      %v1460 = vmul.f32 %v1411, %v1457
      %v1461 = vmul.f32 %v1412, %v1457
      %v1462 = vmul.f32 %v1413, %v1457
      %v1463 = vmul.f32 %v1414, %v1457
      %v1464 = vmul.f32 %v1415, %v1457
      %v1465 = vmul.f32 %v1416, %v1457
      %v1466 = vmul.f32 %v1430, %v1457
      %v1467 = vsub.f32 %v1458, %v1466
      %v1468 = vsub.f32 %v1459, %v1466
      %v1469 = vsub.f32 %v1460, %v1466
      %v1470 = vsub.f32 %v1461, %v1466
      %v1471 = vsub.f32 %v1462, %v1466
      %v1472 = vsub.f32 %v1463, %v1466
      %v1473 = vsub.f32 %v1464, %v1466
      %v1474 = vsub.f32 %v1465, %v1466
      %vm1475 = vcmp.ge.f32.partialorder %v1467, 0.0
      %vm1476 = vcmp.ge.f32.partialorder %v1468, 0.0
      %vm1477 = vcmp.ge.f32.partialorder %v1469, 0.0
      %vm1478 = vcmp.ge.f32.partialorder %v1470, 0.0
      %vm1479 = vcmp.ge.f32.partialorder %v1471, 0.0
      %vm1480 = vcmp.ge.f32.partialorder %v1472, 0.0
      %vm1481 = vcmp.ge.f32.partialorder %v1473, 0.0
      %vm1482 = vcmp.ge.f32.partialorder %v1474, 0.0
      %v1483 = vmul.f32 %v1467, 0.2
      %v1484 = vmul.f32 %v1468, 0.2
      %v1485 = vmul.f32 %v1469, 0.2
      %v1486 = vmul.f32 %v1470, 0.2
      %v1487 = vmul.f32 %v1471, 0.2
      %v1488 = vmul.f32 %v1472, 0.2
      %v1489 = vmul.f32 %v1473, 0.2
      %v1490 = vmul.f32 %v1474, 0.2
      %v1491 = vsel %vm1475, %v1467, %v1483
      %v1492 = vsel %vm1476, %v1468, %v1484
      %v1493 = vsel %vm1477, %v1469, %v1485
      %v1494 = vsel %vm1478, %v1470, %v1486
      %v1495 = vsel %vm1479, %v1471, %v1487
      %v1496 = vsel %vm1480, %v1472, %v1488
      %v1497 = vsel %vm1481, %v1473, %v1489
      %v1498 = vsel %vm1482, %v1474, %v1490
      %1499 = vst [vmem:[%s170] sm:$0xff] %v1491
      %1500 = vst [vmem:[%s170 + $0x8] sm:$0xff] %v1492
      %1501 = vst [vmem:[%s170 + $0x10] sm:$0xff] %v1493
      %1502 = vst [vmem:[%s170 + $0x18] sm:$0xff] %v1494
      %1503 = vst [vmem:[%s170 + $0x20] sm:$0xff] %v1495
      %1504 = vst [vmem:[%s170 + $0x28] sm:$0xff] %v1496
      %1505 = vst [vmem:[%s170 + $0x30] sm:$0xff] %v1497
      %1506 = vst [vmem:[%s170 + $0x38] sm:$0xff] %v1498
      %p1507 = scmp.lt.s32.totalorder %s14, 1
      %s1508 = scalar_select %p1507, %s14, 1
      %s1509 = smul.addr %s1508, 8
      %s1510 = smul.addr %s1509, 8
      %s1511 = scalar_lea.vmem %s3, %s1510
      // Predicated region
      $region33: #{down_conv_forward.1} parent=31 // pred_check
        %p1512 = pneg %p100
      $region34: #{down_conv_forward.1} parent=31 // pred_check_branch
        %1514 = sbr.rel (%p1512) target = $region36
      $region35: #{down_conv_forward.1} parent=31 // pred_region
        _
      $region36: #{down_conv_forward.1} parent=31 // pred_fallthru
        _
    $region32: #{down_conv_forward.1} parent=5 // pred_fallthru
      _
    %p1515 = scmp.le.s32.totalorder 2, %s9
    // Predicated region
    $region37: #{down_conv_forward.1} parent=5 // pred_check
      %p1516 = pneg %p1515
    $region38: #{down_conv_forward.1} parent=5 // pred_check_branch
      %1518 = sbr.rel (%p1516) target = $region40
    $region39: #{down_conv_forward.1} parent=5 // pred_region
      %s1519 = ssub.s32 %s9, 2
      // Predicated region
      $region41: #{down_conv_forward.1} parent=39 // pred_check
        %p1520 = pneg %p106
      $region42: #{down_conv_forward.1} parent=39 // pred_check_branch
        %1522 = sbr.rel (%p1520) target = $region44
      $region43: #{down_conv_forward.1} parent=39 // pred_region
        %p1523 = scmp.lt.s32.totalorder %s15, 1
        %s1524 = scalar_select %p1523, %s15, 1
        %s1525 = smul.addr %s1524, 8
        %s1526 = smul.addr %s1525, 8
        %s1527 = scalar_lea.vmem %s3, %s1526
      $region44: #{down_conv_forward.1} parent=39 // pred_fallthru
        _
    $region40: #{down_conv_forward.1} parent=5 // pred_fallthru
      _
  $region6: #{down_conv_forward.1} parent=0 // loop_footer
    %s13 = sadd.s32 1, %s9
  $region7: #{down_conv_forward.1} parent=0 // loop_footer_branch
    %8 = sbr.rel target = $region3
  $region8: #{down_conv_forward.1} parent=0 // loop_exit
    _

</llo_original>
